<compile_context>
chip_gen: v7x
topology: tpu7x:2x2x1
jax: 0.10.0
libtpu: 0.0.40
codegen_flags: <defaults>
</compile_context>

<pallas_src>
import functools

import jax
import jax.numpy as jnp
from jax.experimental import pallas as pl
from jax.experimental.pallas import tpu as pltpu

HIDDEN_DIM = 512
_LANE = 128
_SUBLANE = 8
_MAX_TB = 512  # batch-tile upper bound (amortizes ~0.35us/step pipeline cost)


def _round_up(x, m):
    return (x + m - 1) // m * m


def _cdiv(a, b):
    return (a + b - 1) // b


def _dqn_kernel(x_ref, w1_ref, b1_ref, w2_ref, b2_ref, w3_ref, b3_ref,
                w4_ref, b4_ref, o_ref):
    # Input tile arrives f32; cast to bf16 once here (no wrapper-side pass).
    x = x_ref[...].astype(jnp.bfloat16)

    # fc1..fc3: bf16 operands, f32 MXU accumulation, bf16 bias+ReLU epilogue.
    h = jnp.dot(x, w1_ref[...], preferred_element_type=jnp.float32)
    h = jnp.maximum(h.astype(jnp.bfloat16) + b1_ref[...], 0)

    h = jnp.dot(h, w2_ref[...], preferred_element_type=jnp.float32)
    h = jnp.maximum(h.astype(jnp.bfloat16) + b2_ref[...], 0)

    h = jnp.dot(h, w3_ref[...], preferred_element_type=jnp.float32)
    h = jnp.maximum(h.astype(jnp.bfloat16) + b3_ref[...], 0)

    # fc4: f32 accumulation + f32 bias; Q-values stored in f32.
    out = jnp.dot(h, w4_ref[...], preferred_element_type=jnp.float32)
    o_ref[...] = (out + b4_ref[...]).astype(o_ref.dtype)


def prepare_params(params):
    """One-time conversion of f32 params into the kernel's wire layout:
    bf16 weights, bf16 hidden biases, f32 output bias, fc4 output dim
    zero-padded to a 128-lane multiple.  Call once (e.g. after each target
    network sync), NOT per forward call."""
    w1, b1 = params["fc1"]
    w2, b2 = params["fc2"]
    w3, b3 = params["fc3"]
    w4, b4 = params["fc4"]
    A = w4.shape[1]
    A_pad = _round_up(A, _LANE)
    w4p = jnp.zeros((w4.shape[0], A_pad), jnp.bfloat16).at[:, :A].set(
        w4.astype(jnp.bfloat16))
    b4p = jnp.zeros((1, A_pad), jnp.float32).at[:, :A].set(b4)
    return {
        "fc1": (w1.astype(jnp.bfloat16), b1.astype(jnp.bfloat16)),
        "fc2": (w2.astype(jnp.bfloat16), b2.astype(jnp.bfloat16)),
        "fc3": (w3.astype(jnp.bfloat16), b3.astype(jnp.bfloat16)),
        "fc4": (w4p, b4p),
    }


@functools.partial(jax.jit, static_argnames=("action_dim",))
def dqn_forward(x, prepared, *, action_dim):
    """x: [B, state_dim] f32.  prepared: output of prepare_params()."""
    w1, b1 = prepared["fc1"]
    w2, b2 = prepared["fc2"]
    w3, b3 = prepared["fc3"]
    w4, b4 = prepared["fc4"]

    B, S = x.shape
    H = w1.shape[1]
    A_pad = w4.shape[1]

    # Balanced batch tiling: tiles are 8-row (sublane) multiples, padding
    # waste <8 rows per tile, and >=2 grid steps once B8 >= 16 so the
    # "parallel" axis shards across v7x's two TensorCores.
    B8 = _round_up(max(B, 1), _SUBLANE)
    n_tiles = _cdiv(B8, _MAX_TB)
    if B8 >= 2 * _SUBLANE:
        n_tiles = max(n_tiles, 2)
    TB = _round_up(_cdiv(B8, n_tiles), _SUBLANE)
    B_pad = _round_up(B8, TB)

    if B_pad != B:
        x = jnp.pad(x, ((0, B_pad - B), (0, 0)))

    const = lambda shape: pl.BlockSpec(shape, lambda i: (0, 0))

    out = pl.pallas_call(
        _dqn_kernel,
        out_shape=jax.ShapeDtypeStruct((B_pad, A_pad), jnp.float32),
        grid=(B_pad // TB,),
        in_specs=[
            pl.BlockSpec((TB, S), lambda i: (i, 0)),   # x tile (f32; S = full dim)
            const((S, H)), const((1, H)),              # fc1 (VMEM-resident)
            const((H, H)), const((1, H)),              # fc2
            const((H, H)), const((1, H)),              # fc3
            const((H, A_pad)), const((1, A_pad)),      # fc4
        ],
        out_specs=pl.BlockSpec((TB, A_pad), lambda i: (i, 0)),
        compiler_params=pltpu.CompilerParams(
            dimension_semantics=("parallel",)),
    )(x, w1, b1, w2, b2, w3, b3, w4, b4)

    return out[:B, :action_dim]


def init_dqn_params(key, state_dim, action_dim):
    """Deterministic init matching PyTorch nn.Linear default (uniform with
    bound 1/sqrt(fan_in) for weight and bias); weights stored [in, out]."""
    dims = [(state_dim, HIDDEN_DIM), (HIDDEN_DIM, HIDDEN_DIM),
            (HIDDEN_DIM, HIDDEN_DIM), (HIDDEN_DIM, action_dim)]
    names = ["fc1", "fc2", "fc3", "fc4"]
    params = {}
    for name, (fan_in, fan_out) in zip(names, dims):
        key, kw, kb = jax.random.split(key, 3)
        bound = 1.0 / jnp.sqrt(jnp.float32(fan_in))
        w = jax.random.uniform(kw, (fan_in, fan_out), jnp.float32, -bound, bound)
        b = jax.random.uniform(kb, (1, fan_out), jnp.float32, -bound, bound)
        params[name] = (w, b)
    return params


def dqn_reference(x, params):
    """Pure-JAX reference matching the kernel numerics (bf16 operands,
    f32 MXU accumulation, bf16 bias+ReLU epilogue, f32 final bias)."""
    h = x.astype(jnp.bfloat16)
    for name in ["fc1", "fc2", "fc3"]:
        w, b = params[name]
        acc = jnp.dot(h, w.astype(jnp.bfloat16),
                      preferred_element_type=jnp.float32)
        h = jnp.maximum(acc.astype(jnp.bfloat16) + b.astype(jnp.bfloat16), 0)
    w, b = params["fc4"]
    return jnp.dot(h, w.astype(jnp.bfloat16),
                   preferred_element_type=jnp.float32) + b


if __name__ == "__main__":
    key = jax.random.PRNGKey(0)
    key, kx = jax.random.split(key)

    batch = 2
    state_dim = 32
    action_dim = 8

    params = init_dqn_params(key, state_dim, action_dim)
    prepared = prepare_params(params)          # one-time weight prep
    x = jax.random.normal(kx, (batch, state_dim), jnp.float32)

    out = dqn_forward(x, prepared, action_dim=action_dim)
    out = jax.block_until_ready(out)

    ref = dqn_reference(x, params)
    assert out.shape == (batch, action_dim), out.shape
    assert jnp.allclose(out, ref, atol=1e-2, rtol=1e-2), "mismatch vs reference"

    print("KERNEL_OK")
</pallas_src>

<mosaic_0001>
module attributes {stable_mosaic.version = 11 : i64} {
  func.func @_dqn_kernel(%arg0: i32, %arg1: memref<8x32xf32, #tpu.memory_space<vmem>>, %arg2: memref<32x512xbf16, #tpu.memory_space<vmem>>, %arg3: memref<1x512xbf16, #tpu.memory_space<vmem>>, %arg4: memref<512x512xbf16, #tpu.memory_space<vmem>>, %arg5: memref<1x512xbf16, #tpu.memory_space<vmem>>, %arg6: memref<512x512xbf16, #tpu.memory_space<vmem>>, %arg7: memref<1x512xbf16, #tpu.memory_space<vmem>>, %arg8: memref<512x128xbf16, #tpu.memory_space<vmem>>, %arg9: memref<1x128xf32, #tpu.memory_space<vmem>>, %arg10: memref<8x128xf32, #tpu.memory_space<vmem>>) attributes {dimension_semantics = [#tpu.dimension_semantics<parallel>], iteration_bounds = array<i64: 1>, scalar_prefetch = 0 : i64, scratch_operands = 0 : i64, tpu.core_type = #tpu.core_type<tc>, window_params = [{transform_indices = @transform_0, window_bounds = array<i64: 8, 32>}, {pipeline_mode = #tpu.pipeline_mode<synchronous>, transform_indices = @transform_1, window_bounds = array<i64: 32, 512>}, {pipeline_mode = #tpu.pipeline_mode<synchronous>, transform_indices = @transform_2, window_bounds = array<i64: 1, 512>}, {pipeline_mode = #tpu.pipeline_mode<synchronous>, transform_indices = @transform_3, window_bounds = array<i64: 512, 512>}, {pipeline_mode = #tpu.pipeline_mode<synchronous>, transform_indices = @transform_4, window_bounds = array<i64: 1, 512>}, {pipeline_mode = #tpu.pipeline_mode<synchronous>, transform_indices = @transform_5, window_bounds = array<i64: 512, 512>}, {pipeline_mode = #tpu.pipeline_mode<synchronous>, transform_indices = @transform_6, window_bounds = array<i64: 1, 512>}, {pipeline_mode = #tpu.pipeline_mode<synchronous>, transform_indices = @transform_7, window_bounds = array<i64: 512, 128>}, {pipeline_mode = #tpu.pipeline_mode<synchronous>, transform_indices = @transform_8, window_bounds = array<i64: 1, 128>}, {transform_indices = @transform_9, window_bounds = array<i64: 8, 128>}]} {
    %c0 = arith.constant 0 : index
    %c0_0 = arith.constant 0 : index
    %0 = vector.load %arg1[%c0, %c0_0] : memref<8x32xf32, #tpu.memory_space<vmem>>, vector<8x32xf32>
    %1 = arith.truncf %0 : vector<8x32xf32> to vector<8x32xbf16>
    %c0_1 = arith.constant 0 : index
    %c0_2 = arith.constant 0 : index
    %2 = vector.load %arg2[%c0_1, %c0_2] : memref<32x512xbf16, #tpu.memory_space<vmem>>, vector<32x512xbf16>
    %cst = arith.constant dense<0.000000e+00> : vector<8x512xf32>
    %3 = tpu.matmul %1, %2, %cst {dimension_numbers = #tpu.dot_dimension_numbers<[1], [0], [0], [1], [0, 0, 1, 1], [], []>} : vector<8x32xbf16>, vector<32x512xbf16>, vector<8x512xf32> -> vector<8x512xf32>
    %4 = arith.truncf %3 : vector<8x512xf32> to vector<8x512xbf16>
    %c0_3 = arith.constant 0 : index
    %c0_4 = arith.constant 0 : index
    %5 = vector.load %arg3[%c0_3, %c0_4] : memref<1x512xbf16, #tpu.memory_space<vmem>>, vector<1x512xbf16>
    %6 = vector.broadcast %5 : vector<1x512xbf16> to vector<8x512xbf16>
    %7 = arith.addf %4, %6 : vector<8x512xbf16>
    %cst_5 = arith.constant 0.000000e+00 : bf16
    %8 = vector.broadcast %cst_5 : bf16 to vector<8x512xbf16>
    %9 = arith.maximumf %7, %8 : vector<8x512xbf16>
    %c0_6 = arith.constant 0 : index
    %c0_7 = arith.constant 0 : index
    %10 = vector.load %arg4[%c0_6, %c0_7] : memref<512x512xbf16, #tpu.memory_space<vmem>>, vector<512x512xbf16>
    %cst_8 = arith.constant dense<0.000000e+00> : vector<8x512xf32>
    %11 = tpu.matmul %9, %10, %cst_8 {dimension_numbers = #tpu.dot_dimension_numbers<[1], [0], [0], [1], [0, 0, 1, 1], [], []>} : vector<8x512xbf16>, vector<512x512xbf16>, vector<8x512xf32> -> vector<8x512xf32>
    %12 = arith.truncf %11 : vector<8x512xf32> to vector<8x512xbf16>
    %c0_9 = arith.constant 0 : index
    %c0_10 = arith.constant 0 : index
    %13 = vector.load %arg5[%c0_9, %c0_10] : memref<1x512xbf16, #tpu.memory_space<vmem>>, vector<1x512xbf16>
    %14 = vector.broadcast %13 : vector<1x512xbf16> to vector<8x512xbf16>
    %15 = arith.addf %12, %14 : vector<8x512xbf16>
    %cst_11 = arith.constant 0.000000e+00 : bf16
    %16 = vector.broadcast %cst_11 : bf16 to vector<8x512xbf16>
    %17 = arith.maximumf %15, %16 : vector<8x512xbf16>
    %c0_12 = arith.constant 0 : index
    %c0_13 = arith.constant 0 : index
    %18 = vector.load %arg6[%c0_12, %c0_13] : memref<512x512xbf16, #tpu.memory_space<vmem>>, vector<512x512xbf16>
    %cst_14 = arith.constant dense<0.000000e+00> : vector<8x512xf32>
    %19 = tpu.matmul %17, %18, %cst_14 {dimension_numbers = #tpu.dot_dimension_numbers<[1], [0], [0], [1], [0, 0, 1, 1], [], []>} : vector<8x512xbf16>, vector<512x512xbf16>, vector<8x512xf32> -> vector<8x512xf32>
    %20 = arith.truncf %19 : vector<8x512xf32> to vector<8x512xbf16>
    %c0_15 = arith.constant 0 : index
    %c0_16 = arith.constant 0 : index
    %21 = vector.load %arg7[%c0_15, %c0_16] : memref<1x512xbf16, #tpu.memory_space<vmem>>, vector<1x512xbf16>
    %22 = vector.broadcast %21 : vector<1x512xbf16> to vector<8x512xbf16>
    %23 = arith.addf %20, %22 : vector<8x512xbf16>
    %cst_17 = arith.constant 0.000000e+00 : bf16
    %24 = vector.broadcast %cst_17 : bf16 to vector<8x512xbf16>
    %25 = arith.maximumf %23, %24 : vector<8x512xbf16>
    %c0_18 = arith.constant 0 : index
    %c0_19 = arith.constant 0 : index
    %26 = vector.load %arg8[%c0_18, %c0_19] : memref<512x128xbf16, #tpu.memory_space<vmem>>, vector<512x128xbf16>
    %cst_20 = arith.constant dense<0.000000e+00> : vector<8x128xf32>
    %27 = tpu.matmul %25, %26, %cst_20 {dimension_numbers = #tpu.dot_dimension_numbers<[1], [0], [0], [1], [0, 0, 1, 1], [], []>} : vector<8x512xbf16>, vector<512x128xbf16>, vector<8x128xf32> -> vector<8x128xf32>
    %c0_21 = arith.constant 0 : index
    %c0_22 = arith.constant 0 : index
    %28 = vector.load %arg9[%c0_21, %c0_22] : memref<1x128xf32, #tpu.memory_space<vmem>>, vector<1x128xf32>
    %29 = vector.broadcast %28 : vector<1x128xf32> to vector<8x128xf32>
    %30 = arith.addf %27, %29 : vector<8x128xf32>
    %c0_23 = arith.constant 0 : index
    %c0_24 = arith.constant 0 : index
    %31 = vector.load %arg10[%c0_23, %c0_24] : memref<8x128xf32, #tpu.memory_space<vmem>>, vector<8x128xf32>
    tpu.vector_store %arg10[%c0_23, %c0_24], %30 {strides = array<i32>} : memref<8x128xf32, #tpu.memory_space<vmem>>, vector<8x128xf32>,
    return
  }
  func.func @transform_0(%arg0: i32) -> (i32, i32) {
    %c0_i32 = arith.constant 0 : i32
    %c0_i32_0 = arith.constant 0 : i32
    return %arg0, %c0_i32 : i32, i32
  }
  func.func @transform_1(%arg0: i32) -> (i32, i32) {
    %c0_i32 = arith.constant 0 : i32
    %c0_i32_0 = arith.constant 0 : i32
    %c0_i32_1 = arith.constant 0 : i32
    return %c0_i32, %c0_i32_0 : i32, i32
  }
  func.func @transform_2(%arg0: i32) -> (i32, i32) {
    %c0_i32 = arith.constant 0 : i32
    %c0_i32_0 = arith.constant 0 : i32
    %c0_i32_1 = arith.constant 0 : i32
    return %c0_i32, %c0_i32_0 : i32, i32
  }
  func.func @transform_3(%arg0: i32) -> (i32, i32) {
    %c0_i32 = arith.constant 0 : i32
    %c0_i32_0 = arith.constant 0 : i32
    %c0_i32_1 = arith.constant 0 : i32
    return %c0_i32, %c0_i32_0 : i32, i32
  }
  func.func @transform_4(%arg0: i32) -> (i32, i32) {
    %c0_i32 = arith.constant 0 : i32
    %c0_i32_0 = arith.constant 0 : i32
    %c0_i32_1 = arith.constant 0 : i32
    return %c0_i32, %c0_i32_0 : i32, i32
  }
  func.func @transform_5(%arg0: i32) -> (i32, i32) {
    %c0_i32 = arith.constant 0 : i32
    %c0_i32_0 = arith.constant 0 : i32
    %c0_i32_1 = arith.constant 0 : i32
    return %c0_i32, %c0_i32_0 : i32, i32
  }
  func.func @transform_6(%arg0: i32) -> (i32, i32) {
    %c0_i32 = arith.constant 0 : i32
    %c0_i32_0 = arith.constant 0 : i32
    %c0_i32_1 = arith.constant 0 : i32
    return %c0_i32, %c0_i32_0 : i32, i32
  }
  func.func @transform_7(%arg0: i32) -> (i32, i32) {
    %c0_i32 = arith.constant 0 : i32
    %c0_i32_0 = arith.constant 0 : i32
    %c0_i32_1 = arith.constant 0 : i32
    return %c0_i32, %c0_i32_0 : i32, i32
  }
  func.func @transform_8(%arg0: i32) -> (i32, i32) {
    %c0_i32 = arith.constant 0 : i32
    %c0_i32_0 = arith.constant 0 : i32
    %c0_i32_1 = arith.constant 0 : i32
    return %c0_i32, %c0_i32_0 : i32, i32
  }
  func.func @transform_9(%arg0: i32) -> (i32, i32) {
    %c0_i32 = arith.constant 0 : i32
    %c0_i32_0 = arith.constant 0 : i32
    return %arg0, %c0_i32 : i32, i32
  }
}

</mosaic_0001>

<llo_original>
// kernel: dqn_forward.1
$region0: #{dqn_forward.1}
  #allocation0 [shape = 'u32[]', space=smem, size = 0x4, offset = 0x4, fixed_abs, tag = 'smem constant byte address 0x4 - core index']
  #allocation1 [shape = 'u32[144,128]{1,0:T(1,128)}', space=vmem, size = 0x12000, scoped, tag = 'internal scratch']
  %s0 = inlined_call_operand.vmem [shape: f32[8,32], index: 0, kind: input, shape index: {}]
  %s1 = inlined_call_operand.hbm [shape: bf16[32,512], index: 1, kind: input, shape index: {}]
  %s2 = inlined_call_operand.vmem [shape: bf16[1,512], index: 2, kind: input, shape index: {}]
  %s3 = inlined_call_operand.hbm [shape: bf16[512,512], index: 3, kind: input, shape index: {}]
  %s4 = inlined_call_operand.vmem [shape: bf16[1,512], index: 4, kind: input, shape index: {}]
  %s5 = inlined_call_operand.hbm [shape: bf16[512,512], index: 5, kind: input, shape index: {}]
  %s6 = inlined_call_operand.vmem [shape: bf16[1,512], index: 6, kind: input, shape index: {}]
  %s7 = inlined_call_operand.hbm [shape: bf16[512,128], index: 7, kind: input, shape index: {}]
  %s8 = inlined_call_operand.vmem [shape: f32[1,128], index: 8, kind: input, shape index: {}]
  %s9 = inlined_call_operand.vmem [shape: f32[8,128], index: 9, kind: output, shape index: {}]
  %s10 = sld [smem:[#allocation0]]
  $region62: #{dqn_forward.1} parent=0
    _
  %s12 = ssub.s32 1, %s10
  %s13 = scalar_select 0, %s12, %s10
  $region1: #{dqn_forward.1} parent=0
    #allocation2 [shape = 'u8[32768]{0}', space=vmem, size = 0x8000, scoped, tag = 'input window, operand 1, single buffered']
    #allocation3 [shape = 's32[1]{0}', space=sflag, size = 0x4, scoped, tag = 'scoped memory for dqn_forward.1']
    #allocation4 [shape = 'u8[524288]{0}', space=vmem, size = 0x80000, scoped, tag = 'input window, operand 3, single buffered']
    #allocation5 [shape = 's32[1]{0}', space=sflag, size = 0x4, scoped, tag = 'scoped memory for dqn_forward.1']
    #allocation6 [shape = 'u8[524288]{0}', space=vmem, size = 0x80000, scoped, tag = 'input window, operand 5, single buffered']
    #allocation7 [shape = 'u8[131072]{0}', space=vmem, size = 0x20000, scoped, tag = 'input window, operand 7, single buffered']
    #allocation8 [shape = 's32[1]{0}', space=sflag, size = 0x4, scoped, tag = 'scoped memory for dqn_forward.1']
    %14 = vsyncpa [#allocation3], 0
    %15 = vsyncpa [#allocation5], 0
    %16 = vsyncpa [#allocation8], 0
    // Predicated region
    $region2: #{dqn_forward.1} parent=1 // pred_check
      _
    $region3: #{dqn_forward.1} parent=1 // pred_check_branch
      %18 = sbr.rel (0) target = $region5
    $region4: #{dqn_forward.1} parent=1 // pred_region
      _
    $region5: #{dqn_forward.1} parent=1 // pred_fallthru
      _
    // Predicated region
    $region6: #{dqn_forward.1} parent=1 // pred_check
      _
    $region7: #{dqn_forward.1} parent=1 // pred_check_branch
      %20 = sbr.rel (0) target = $region9
    $region8: #{dqn_forward.1} parent=1 // pred_region
      %s22 = ssub.s32 1024, 1024
      %23 = vsyncadd [#allocation3], %s22
      %s24 = sshll.u32 [#allocation2], 4
      %s25 = int_to_ptr.vmem [resolvable:$true] %s24
      %30 = dma.hbm_to_vmem [thread:$0]  %s1, 1024, %s25, [#allocation3], 256, 256, 16
    $region9: #{dqn_forward.1} parent=1 // pred_fallthru
      _
    // Predicated region
    $region10: #{dqn_forward.1} parent=1 // pred_check
      _
    $region11: #{dqn_forward.1} parent=1 // pred_check_branch
      %32 = sbr.rel (0) target = $region13
    $region12: #{dqn_forward.1} parent=1 // pred_region
      _
    $region13: #{dqn_forward.1} parent=1 // pred_fallthru
      _
    // Predicated region
    $region14: #{dqn_forward.1} parent=1 // pred_check
      _
    $region15: #{dqn_forward.1} parent=1 // pred_check_branch
      %34 = sbr.rel (0) target = $region17
    $region16: #{dqn_forward.1} parent=1 // pred_region
      %s36 = ssub.s32 16384, 16384
      %37 = vsyncadd [#allocation5], %s36
      %s38 = sshll.u32 [#allocation4], 4
      %s39 = int_to_ptr.vmem [resolvable:$true] %s38
      %44 = dma.hbm_to_vmem [thread:$0]  %s3, 16384, %s39, [#allocation5], 256, 256, 16
    $region17: #{dqn_forward.1} parent=1 // pred_fallthru
      _
    // Predicated region
    $region18: #{dqn_forward.1} parent=1 // pred_check
      _
    $region19: #{dqn_forward.1} parent=1 // pred_check_branch
      %46 = sbr.rel (0) target = $region21
    $region20: #{dqn_forward.1} parent=1 // pred_region
      _
    $region21: #{dqn_forward.1} parent=1 // pred_fallthru
      _
    // Predicated region
    $region22: #{dqn_forward.1} parent=1 // pred_check
      _
    $region23: #{dqn_forward.1} parent=1 // pred_check_branch
      %48 = sbr.rel (0) target = $region25
    $region24: #{dqn_forward.1} parent=1 // pred_region
      %s50 = ssub.s32 16384, 16384
      %51 = vsyncadd [#allocation5], %s50
      %s52 = sshll.u32 [#allocation6], 4
      %s53 = int_to_ptr.vmem [resolvable:$true] %s52
      %58 = dma.hbm_to_vmem [thread:$0]  %s5, 16384, %s53, [#allocation5], 256, 256, 16
    $region25: #{dqn_forward.1} parent=1 // pred_fallthru
      _
    // Predicated region
    $region26: #{dqn_forward.1} parent=1 // pred_check
      _
    $region27: #{dqn_forward.1} parent=1 // pred_check_branch
      %60 = sbr.rel (0) target = $region29
    $region28: #{dqn_forward.1} parent=1 // pred_region
      _
    $region29: #{dqn_forward.1} parent=1 // pred_fallthru
      _
    // Predicated region
    $region30: #{dqn_forward.1} parent=1 // pred_check
      _
    $region31: #{dqn_forward.1} parent=1 // pred_check_branch
      %62 = sbr.rel (0) target = $region33
    $region32: #{dqn_forward.1} parent=1 // pred_region
      %s64 = ssub.s32 4096, 4096
      %65 = vsyncadd [#allocation8], %s64
      %s66 = sshll.u32 [#allocation7], 4
      %s67 = int_to_ptr.vmem [resolvable:$true] %s66
      %72 = dma.hbm_to_vmem [thread:$0]  %s7, 4096, %s67, [#allocation8], 64, 64, 4
    $region33: #{dqn_forward.1} parent=1 // pred_fallthru
      _
    // Predicated region
    $region34: #{dqn_forward.1} parent=1 // pred_check
      _
    $region35: #{dqn_forward.1} parent=1 // pred_check_branch
      %74 = sbr.rel (0) target = $region37
    $region36: #{dqn_forward.1} parent=1 // pred_region
      _
    $region37: #{dqn_forward.1} parent=1 // pred_fallthru
      _
    // Predicated region
    $region38: #{dqn_forward.1} parent=1 // pred_check
      _
    $region39: #{dqn_forward.1} parent=1 // pred_check_branch
      %76 = sbr.rel (0) target = $region41
    $region40: #{dqn_forward.1} parent=1 // pred_region
      %77 = dma.done [#allocation3], 1024
    $region41: #{dqn_forward.1} parent=1 // pred_fallthru
      _
    // Predicated region
    $region42: #{dqn_forward.1} parent=1 // pred_check
      _
    $region43: #{dqn_forward.1} parent=1 // pred_check_branch
      %79 = sbr.rel (0) target = $region45
    $region44: #{dqn_forward.1} parent=1 // pred_region
      %80 = dma.done [#allocation5], 16384
    $region45: #{dqn_forward.1} parent=1 // pred_fallthru
      _
    // Predicated region
    $region46: #{dqn_forward.1} parent=1 // pred_check
      _
    $region47: #{dqn_forward.1} parent=1 // pred_check_branch
      %82 = sbr.rel (0) target = $region49
    $region48: #{dqn_forward.1} parent=1 // pred_region
      %83 = dma.done [#allocation5], 16384
    $region49: #{dqn_forward.1} parent=1 // pred_fallthru
      _
    // Predicated region
    $region50: #{dqn_forward.1} parent=1 // pred_check
      _
    $region51: #{dqn_forward.1} parent=1 // pred_check_branch
      %85 = sbr.rel (0) target = $region53
    $region52: #{dqn_forward.1} parent=1 // pred_region
      %86 = dma.done [#allocation8], 4096
    $region53: #{dqn_forward.1} parent=1 // pred_fallthru
      _
    %v88 = vld [vmem:[%s0] sm:$0xff]
    %v89 = vpack.c.bf16 %v88, %v88
    %v90 = vld [vmem:[#allocation2] sm:$0xff]
    %v91 = vld [vmem:[#allocation2 + $0x8] sm:$0xff]
    %v92 = vld [vmem:[#allocation2 + $0x10] sm:$0xff]
    %v93 = vld [vmem:[#allocation2 + $0x18] sm:$0xff]
    %v94 = vld [vmem:[#allocation2 + $0x20] sm:$0xff]
    %v95 = vld [vmem:[#allocation2 + $0x28] sm:$0xff]
    %v96 = vld [vmem:[#allocation2 + $0x30] sm:$0xff]
    %v97 = vld [vmem:[#allocation2 + $0x38] sm:$0xff]
    %v106 = vunpack.c.l.b16 %v90
    %v107 = vunpack.c.h.b16 %v90
    %v108 = vunpack.c.l.b16 %v91
    %v109 = vunpack.c.h.b16 %v91
    %v110 = vunpack.c.l.b16 %v92
    %v111 = vunpack.c.h.b16 %v92
    %v112 = vunpack.c.l.b16 %v93
    %v113 = vunpack.c.h.b16 %v93
    %v114 = vunpack.c.l.b16 %v94
    %v115 = vunpack.c.h.b16 %v94
    %v116 = vunpack.c.l.b16 %v95
    %v117 = vunpack.c.h.b16 %v95
    %v118 = vunpack.c.l.b16 %v96
    %v119 = vunpack.c.h.b16 %v96
    %v120 = vunpack.c.l.b16 %v97
    %v121 = vunpack.c.h.b16 %v97
    %v122 = vpack.c.b16 %v110, %v106
    %v123 = vpack.c.b16 %v111, %v107
    %v124 = vpack.c.b16 %v112, %v108
    %v125 = vpack.c.b16 %v113, %v109
    %v126 = vpack.c.b16 %v118, %v114
    %v127 = vpack.c.b16 %v119, %v115
    %v128 = vpack.c.b16 %v120, %v116
    %v129 = vpack.c.b16 %v121, %v117
    %vm138 = vcmask 261120
    %v140 = vsel %vm138, %v89, 0
    %142 = vmatprep.subr.bf16.mxu0 %v123
    %143 = vmatpush1.bf16.msra.mxu0 %v122
    %144 = vmatprep.subr.bf16.mxu0 %v127
    %145 = vmatpush1.bf16.msra.mxu0 %v126
    %146 = vmatprep.subr.bf16.mxu0 0
    %147 = vmatpush1.bf16.msra.mxu0 0
    %148 = vmatprep.subr.bf16.mxu0 0
    %149 = vmatpush1.bf16.msra.mxu0 0
    %150 = vmatprep.subr.bf16.mxu0 0
    %151 = vmatpush1.bf16.msra.mxu0 0
    %152 = vmatprep.subr.bf16.mxu0 0
    %153 = vmatpush1.bf16.msra.mxu0 0
    %154 = vmatprep.subr.bf16.mxu0 0
    %155 = vmatpush1.bf16.msra.mxu0 0
    %156 = vmatprep.subr.bf16.mxu0 0
    %157 = vmatpush1.bf16.msra.mxu0 0
    %158 = vmatprep.subr.bf16.mxu0 0
    %159 = vmatpush1.bf16.msra.mxu0 0
    %160 = vmatprep.subr.bf16.mxu0 0
    %161 = vmatpush1.bf16.msra.mxu0 0
    %162 = vmatprep.subr.bf16.mxu0 0
    %163 = vmatpush1.bf16.msra.mxu0 0
    %164 = vmatprep.subr.bf16.mxu0 0
    %165 = vmatpush1.bf16.msra.mxu0 0
    %166 = vmatprep.subr.bf16.mxu0 0
    %167 = vmatpush1.bf16.msra.mxu0 0
    %168 = vmatprep.subr.bf16.mxu0 0
    %169 = vmatpush1.bf16.msra.mxu0 0
    %170 = vmatprep.subr.bf16.mxu0 0
    %171 = vmatpush1.bf16.msra.mxu0 0
    %172 = vmatprep.subr.bf16.mxu0 0
    %173 = vmatpush1.bf16.msra.mxu0 0
    %174 = vmatprep.mubr.bf16.mxu0 0
    %175 = vmatmul.mubr.bf16.gmra.mrb[0].mxu0 %v140
    %v176 = vpop.f32.mrb[0].mxu0
    %v177 = vadd.f32 0.0, %v176
    %v178 = vpop.f32.mrb[0].mxu0
    %v179 = vadd.f32 0.0, %v178
    %v180 = vpop.f32.mrb[0].mxu0
    %v181 = vpop.f32.mrb[0].mxu0
    %182 = vdwg.mxu0
    %183 = vmatprep.subr.bf16.mxu0 %v125
    %184 = vmatpush1.bf16.msra.mxu0 %v124
    %185 = vmatprep.subr.bf16.mxu0 %v129
    %186 = vmatpush1.bf16.msra.mxu0 %v128
    %187 = vmatprep.subr.bf16.mxu0 0
    %188 = vmatpush1.bf16.msra.mxu0 0
    %189 = vmatprep.subr.bf16.mxu0 0
    %190 = vmatpush1.bf16.msra.mxu0 0
    %191 = vmatprep.subr.bf16.mxu0 0
    %192 = vmatpush1.bf16.msra.mxu0 0
    %193 = vmatprep.subr.bf16.mxu0 0
    %194 = vmatpush1.bf16.msra.mxu0 0
    %195 = vmatprep.subr.bf16.mxu0 0
    %196 = vmatpush1.bf16.msra.mxu0 0
    %197 = vmatprep.subr.bf16.mxu0 0
    %198 = vmatpush1.bf16.msra.mxu0 0
    %199 = vmatprep.subr.bf16.mxu0 0
    %200 = vmatpush1.bf16.msra.mxu0 0
    %201 = vmatprep.subr.bf16.mxu0 0
    %202 = vmatpush1.bf16.msra.mxu0 0
    %203 = vmatprep.subr.bf16.mxu0 0
    %204 = vmatpush1.bf16.msra.mxu0 0
    %205 = vmatprep.subr.bf16.mxu0 0
    %206 = vmatpush1.bf16.msra.mxu0 0
    %207 = vmatprep.subr.bf16.mxu0 0
    %208 = vmatpush1.bf16.msra.mxu0 0
    %209 = vmatprep.subr.bf16.mxu0 0
    %210 = vmatpush1.bf16.msra.mxu0 0
    %211 = vmatprep.subr.bf16.mxu0 0
    %212 = vmatpush1.bf16.msra.mxu0 0
    %213 = vmatprep.subr.bf16.mxu0 0
    %214 = vmatpush1.bf16.msra.mxu0 0
    %215 = vmatprep.mubr.bf16.mxu0 0
    %216 = vmatmul.mubr.bf16.gmra.mrb[0].mxu0 %v140
    %v217 = vpop.f32.mrb[0].mxu0
    %v218 = vadd.f32 0.0, %v217
    %v219 = vpop.f32.mrb[0].mxu0
    %v220 = vadd.f32 0.0, %v219
    %v221 = vpop.f32.mrb[0].mxu0
    %v222 = vpop.f32.mrb[0].mxu0
    %223 = vdwg.mxu0
    %v224 = vpack.c.bf16 %v177, %v177
    %v225 = vpack.c.bf16 %v179, %v179
    %v226 = vpack.c.bf16 %v218, %v218
    %v227 = vpack.c.bf16 %v220, %v220
    %v228 = vld [vmem:[%s2] sm:$0xf]
    %v231 = vunpack.c.l.s4 1966171168
    %v232 = vunpack.c.0.s8 %v231
    %v233 = vlaneseq
    %v234 = vshrl.u32 %v233, 7
    %v235 = vsub.s32 %v232, %v234
    %v236 = vrot.slane %v228, %v235
    %v237 = vcombine.high %v236, %v236
    %v239 = vunpack.c.l.s4 1966171168
    %v240 = vunpack.c.0.s8 %v239
    %v241 = vlaneseq
    %v242 = vshrl.u32 %v241, 7
    %v243 = vsub.s32 %v240, %v242
    %v244 = vrot.slane %v236, %v243
    %v246 = vunpack.c.l.s4 1966171168
    %v247 = vunpack.c.0.s8 %v246
    %v248 = vlaneseq
    %v249 = vshrl.u32 %v248, 7
    %v250 = vsub.s32 %v247, %v249
    %v251 = vrot.slane %v237, %v250
    %v252 = vcombine.high %v244, %v244
    %v253 = vcombine.high %v251, %v251
    %v255 = vpack.i.b16 %v244, %v244
    %v257 = vlaneseq
    %v258 = vshrl.u32 %v257, 7
    %v259 = vsub.s32 0, %v258
    %v260 = vrot.slane %v255, %v259
    %v262 = vpack.i.b16 %v251, %v251
    %v264 = vlaneseq
    %v265 = vshrl.u32 %v264, 7
    %v266 = vsub.s32 0, %v265
    %v267 = vrot.slane %v262, %v266
    %v269 = vpack.i.b16 %v252, %v252
    %v271 = vlaneseq
    %v272 = vshrl.u32 %v271, 7
    %v273 = vsub.s32 0, %v272
    %v274 = vrot.slane %v269, %v273
    %v276 = vpack.i.b16 %v253, %v253
    %v278 = vlaneseq
    %v279 = vshrl.u32 %v278, 7
    %v280 = vsub.s32 0, %v279
    %v281 = vrot.slane %v276, %v280
    %v282 = vadd.bf16 %v224, %v260
    %v283 = vadd.bf16 %v225, %v267
    %v284 = vadd.bf16 %v226, %v274
    %v285 = vadd.bf16 %v227, %v281
    %v286 = vmax.bf16 %v282, 0
    %v287 = vmax.bf16 %v283, 0
    %v288 = vmax.bf16 %v284, 0
    %v289 = vmax.bf16 %v285, 0
    %v290 = vld [vmem:[#allocation4] sm:$0xff]
    %v291 = vld [vmem:[#allocation4 + $0x8] sm:$0xff]
    %v292 = vld [vmem:[#allocation4 + $0x10] sm:$0xff]
    %v293 = vld [vmem:[#allocation4 + $0x18] sm:$0xff]
    %v294 = vld [vmem:[#allocation4 + $0x20] sm:$0xff]
    %v295 = vld [vmem:[#allocation4 + $0x28] sm:$0xff]
    %v296 = vld [vmem:[#allocation4 + $0x30] sm:$0xff]
    %v297 = vld [vmem:[#allocation4 + $0x38] sm:$0xff]
    %v298 = vld [vmem:[#allocation4 + $0x40] sm:$0xff]
    %v299 = vld [vmem:[#allocation4 + $0x48] sm:$0xff]
    %v300 = vld [vmem:[#allocation4 + $0x50] sm:$0xff]
    %v301 = vld [vmem:[#allocation4 + $0x58] sm:$0xff]
    %v302 = vld [vmem:[#allocation4 + $0x60] sm:$0xff]
    %v303 = vld [vmem:[#allocation4 + $0x68] sm:$0xff]
    %v304 = vld [vmem:[#allocation4 + $0x70] sm:$0xff]
    %v305 = vld [vmem:[#allocation4 + $0x78] sm:$0xff]
    %v306 = vld [vmem:[#allocation4 + $0x80] sm:$0xff]
    %v307 = vld [vmem:[#allocation4 + $0x88] sm:$0xff]
    %v308 = vld [vmem:[#allocation4 + $0x90] sm:$0xff]
    %v309 = vld [vmem:[#allocation4 + $0x98] sm:$0xff]
    %v310 = vld [vmem:[#allocation4 + $0xa0] sm:$0xff]
    %v311 = vld [vmem:[#allocation4 + $0xa8] sm:$0xff]
    %v312 = vld [vmem:[#allocation4 + $0xb0] sm:$0xff]
    %v313 = vld [vmem:[#allocation4 + $0xb8] sm:$0xff]
    %v314 = vld [vmem:[#allocation4 + $0xc0] sm:$0xff]
    %v315 = vld [vmem:[#allocation4 + $0xc8] sm:$0xff]
    %v316 = vld [vmem:[#allocation4 + $0xd0] sm:$0xff]
    %v317 = vld [vmem:[#allocation4 + $0xd8] sm:$0xff]
    %v318 = vld [vmem:[#allocation4 + $0xe0] sm:$0xff]
    %v319 = vld [vmem:[#allocation4 + $0xe8] sm:$0xff]
    %v320 = vld [vmem:[#allocation4 + $0xf0] sm:$0xff]
    %v321 = vld [vmem:[#allocation4 + $0xf8] sm:$0xff]
    %v322 = vld [vmem:[#allocation4 + $0x100] sm:$0xff]
    %v323 = vld [vmem:[#allocation4 + $0x108] sm:$0xff]
    %v324 = vld [vmem:[#allocation4 + $0x110] sm:$0xff]
    %v325 = vld [vmem:[#allocation4 + $0x118] sm:$0xff]
    %v326 = vld [vmem:[#allocation4 + $0x120] sm:$0xff]
    %v327 = vld [vmem:[#allocation4 + $0x128] sm:$0xff]
    %v328 = vld [vmem:[#allocation4 + $0x130] sm:$0xff]
    %v329 = vld [vmem:[#allocation4 + $0x138] sm:$0xff]
    %v330 = vld [vmem:[#allocation4 + $0x140] sm:$0xff]
    %v331 = vld [vmem:[#allocation4 + $0x148] sm:$0xff]
    %v332 = vld [vmem:[#allocation4 + $0x150] sm:$0xff]
    %v333 = vld [vmem:[#allocation4 + $0x158] sm:$0xff]
    %v334 = vld [vmem:[#allocation4 + $0x160] sm:$0xff]
    %v335 = vld [vmem:[#allocation4 + $0x168] sm:$0xff]
    %v336 = vld [vmem:[#allocation4 + $0x170] sm:$0xff]
    %v337 = vld [vmem:[#allocation4 + $0x178] sm:$0xff]
    %v338 = vld [vmem:[#allocation4 + $0x180] sm:$0xff]
    %v339 = vld [vmem:[#allocation4 + $0x188] sm:$0xff]
    %v340 = vld [vmem:[#allocation4 + $0x190] sm:$0xff]
    %v341 = vld [vmem:[#allocation4 + $0x198] sm:$0xff]
    %v342 = vld [vmem:[#allocation4 + $0x1a0] sm:$0xff]
    %v343 = vld [vmem:[#allocation4 + $0x1a8] sm:$0xff]
    %v344 = vld [vmem:[#allocation4 + $0x1b0] sm:$0xff]
    %v345 = vld [vmem:[#allocation4 + $0x1b8] sm:$0xff]
    %v346 = vld [vmem:[#allocation4 + $0x1c0] sm:$0xff]
    %v347 = vld [vmem:[#allocation4 + $0x1c8] sm:$0xff]
    %v348 = vld [vmem:[#allocation4 + $0x1d0] sm:$0xff]
    %v349 = vld [vmem:[#allocation4 + $0x1d8] sm:$0xff]
    %v350 = vld [vmem:[#allocation4 + $0x1e0] sm:$0xff]
    %v351 = vld [vmem:[#allocation4 + $0x1e8] sm:$0xff]
    %v352 = vld [vmem:[#allocation4 + $0x1f0] sm:$0xff]
    %v353 = vld [vmem:[#allocation4 + $0x1f8] sm:$0xff]
    %v354 = vld [vmem:[#allocation4 + $0x200] sm:$0xff]
    %v355 = vld [vmem:[#allocation4 + $0x208] sm:$0xff]
    %v356 = vld [vmem:[#allocation4 + $0x210] sm:$0xff]
    %v357 = vld [vmem:[#allocation4 + $0x218] sm:$0xff]
    %v358 = vld [vmem:[#allocation4 + $0x220] sm:$0xff]
    %v359 = vld [vmem:[#allocation4 + $0x228] sm:$0xff]
    %v360 = vld [vmem:[#allocation4 + $0x230] sm:$0xff]
    %v361 = vld [vmem:[#allocation4 + $0x238] sm:$0xff]
    %v362 = vld [vmem:[#allocation4 + $0x240] sm:$0xff]
    %v363 = vld [vmem:[#allocation4 + $0x248] sm:$0xff]
    %v364 = vld [vmem:[#allocation4 + $0x250] sm:$0xff]
    %v365 = vld [vmem:[#allocation4 + $0x258] sm:$0xff]
    %v366 = vld [vmem:[#allocation4 + $0x260] sm:$0xff]
    %v367 = vld [vmem:[#allocation4 + $0x268] sm:$0xff]
    %v368 = vld [vmem:[#allocation4 + $0x270] sm:$0xff]
    %v369 = vld [vmem:[#allocation4 + $0x278] sm:$0xff]
    %v370 = vld [vmem:[#allocation4 + $0x280] sm:$0xff]
    %v371 = vld [vmem:[#allocation4 + $0x288] sm:$0xff]
    %v372 = vld [vmem:[#allocation4 + $0x290] sm:$0xff]
    %v373 = vld [vmem:[#allocation4 + $0x298] sm:$0xff]
    %v374 = vld [vmem:[#allocation4 + $0x2a0] sm:$0xff]
    %v375 = vld [vmem:[#allocation4 + $0x2a8] sm:$0xff]
    %v376 = vld [vmem:[#allocation4 + $0x2b0] sm:$0xff]
    %v377 = vld [vmem:[#allocation4 + $0x2b8] sm:$0xff]
    %v378 = vld [vmem:[#allocation4 + $0x2c0] sm:$0xff]
    %v379 = vld [vmem:[#allocation4 + $0x2c8] sm:$0xff]
    %v380 = vld [vmem:[#allocation4 + $0x2d0] sm:$0xff]
    %v381 = vld [vmem:[#allocation4 + $0x2d8] sm:$0xff]
    %v382 = vld [vmem:[#allocation4 + $0x2e0] sm:$0xff]
    %v383 = vld [vmem:[#allocation4 + $0x2e8] sm:$0xff]
    %v384 = vld [vmem:[#allocation4 + $0x2f0] sm:$0xff]
    %v385 = vld [vmem:[#allocation4 + $0x2f8] sm:$0xff]
    %v386 = vld [vmem:[#allocation4 + $0x300] sm:$0xff]
    %v387 = vld [vmem:[#allocation4 + $0x308] sm:$0xff]
    %v388 = vld [vmem:[#allocation4 + $0x310] sm:$0xff]
    %v389 = vld [vmem:[#allocation4 + $0x318] sm:$0xff]
    %v390 = vld [vmem:[#allocation4 + $0x320] sm:$0xff]
    %v391 = vld [vmem:[#allocation4 + $0x328] sm:$0xff]
    %v392 = vld [vmem:[#allocation4 + $0x330] sm:$0xff]
    %v393 = vld [vmem:[#allocation4 + $0x338] sm:$0xff]
    %v394 = vld [vmem:[#allocation4 + $0x340] sm:$0xff]
    %v395 = vld [vmem:[#allocation4 + $0x348] sm:$0xff]
    %v396 = vld [vmem:[#allocation4 + $0x350] sm:$0xff]
    %v397 = vld [vmem:[#allocation4 + $0x358] sm:$0xff]
    %v398 = vld [vmem:[#allocation4 + $0x360] sm:$0xff]
    %v399 = vld [vmem:[#allocation4 + $0x368] sm:$0xff]
    %v400 = vld [vmem:[#allocation4 + $0x370] sm:$0xff]
    %v401 = vld [vmem:[#allocation4 + $0x378] sm:$0xff]
    %v402 = vld [vmem:[#allocation4 + $0x380] sm:$0xff]
    %v403 = vld [vmem:[#allocation4 + $0x388] sm:$0xff]
    %v404 = vld [vmem:[#allocation4 + $0x390] sm:$0xff]
    %v405 = vld [vmem:[#allocation4 + $0x398] sm:$0xff]
    %v406 = vld [vmem:[#allocation4 + $0x3a0] sm:$0xff]
    %v407 = vld [vmem:[#allocation4 + $0x3a8] sm:$0xff]
    %v408 = vld [vmem:[#allocation4 + $0x3b0] sm:$0xff]
    %v409 = vld [vmem:[#allocation4 + $0x3b8] sm:$0xff]
    %v410 = vld [vmem:[#allocation4 + $0x3c0] sm:$0xff]
    %v411 = vld [vmem:[#allocation4 + $0x3c8] sm:$0xff]
    %v412 = vld [vmem:[#allocation4 + $0x3d0] sm:$0xff]
    %v413 = vld [vmem:[#allocation4 + $0x3d8] sm:$0xff]
    %v414 = vld [vmem:[#allocation4 + $0x3e0] sm:$0xff]
    %v415 = vld [vmem:[#allocation4 + $0x3e8] sm:$0xff]
    %v416 = vld [vmem:[#allocation4 + $0x3f0] sm:$0xff]
    %v417 = vld [vmem:[#allocation4 + $0x3f8] sm:$0xff]
    %v546 = vunpack.c.l.b16 %v290
    %v547 = vunpack.c.h.b16 %v290
    %v548 = vunpack.c.l.b16 %v291
    %v549 = vunpack.c.h.b16 %v291
    %v550 = vunpack.c.l.b16 %v292
    %v551 = vunpack.c.h.b16 %v292
    %v552 = vunpack.c.l.b16 %v293
    %v553 = vunpack.c.h.b16 %v293
    %v554 = vunpack.c.l.b16 %v294
    %v555 = vunpack.c.h.b16 %v294
    %v556 = vunpack.c.l.b16 %v295
    %v557 = vunpack.c.h.b16 %v295
    %v558 = vunpack.c.l.b16 %v296
    %v559 = vunpack.c.h.b16 %v296
    %v560 = vunpack.c.l.b16 %v297
    %v561 = vunpack.c.h.b16 %v297
    %v562 = vunpack.c.l.b16 %v298
    %v563 = vunpack.c.h.b16 %v298
    %v564 = vunpack.c.l.b16 %v299
    %v565 = vunpack.c.h.b16 %v299
    %v566 = vunpack.c.l.b16 %v300
    %v567 = vunpack.c.h.b16 %v300
    %v568 = vunpack.c.l.b16 %v301
    %v569 = vunpack.c.h.b16 %v301
    %v570 = vunpack.c.l.b16 %v302
    %v571 = vunpack.c.h.b16 %v302
    %v572 = vunpack.c.l.b16 %v303
    %v573 = vunpack.c.h.b16 %v303
    %v574 = vunpack.c.l.b16 %v304
    %v575 = vunpack.c.h.b16 %v304
    %v576 = vunpack.c.l.b16 %v305
    %v577 = vunpack.c.h.b16 %v305
    %v578 = vunpack.c.l.b16 %v306
    %v579 = vunpack.c.h.b16 %v306
    %v580 = vunpack.c.l.b16 %v307
    %v581 = vunpack.c.h.b16 %v307
    %v582 = vunpack.c.l.b16 %v308
    %v583 = vunpack.c.h.b16 %v308
    %v584 = vunpack.c.l.b16 %v309
    %v585 = vunpack.c.h.b16 %v309
    %v586 = vunpack.c.l.b16 %v310
    %v587 = vunpack.c.h.b16 %v310
    %v588 = vunpack.c.l.b16 %v311
    %v589 = vunpack.c.h.b16 %v311
    %v590 = vunpack.c.l.b16 %v312
    %v591 = vunpack.c.h.b16 %v312
    %v592 = vunpack.c.l.b16 %v313
    %v593 = vunpack.c.h.b16 %v313
    %v594 = vunpack.c.l.b16 %v314
    %v595 = vunpack.c.h.b16 %v314
    %v596 = vunpack.c.l.b16 %v315
    %v597 = vunpack.c.h.b16 %v315
    %v598 = vunpack.c.l.b16 %v316
    %v599 = vunpack.c.h.b16 %v316
    %v600 = vunpack.c.l.b16 %v317
    %v601 = vunpack.c.h.b16 %v317
    %v602 = vunpack.c.l.b16 %v318
    %v603 = vunpack.c.h.b16 %v318
    %v604 = vunpack.c.l.b16 %v319
    %v605 = vunpack.c.h.b16 %v319
    %v606 = vunpack.c.l.b16 %v320
    %v607 = vunpack.c.h.b16 %v320
    %v608 = vunpack.c.l.b16 %v321
    %v609 = vunpack.c.h.b16 %v321
    %v610 = vunpack.c.l.b16 %v322
    %v611 = vunpack.c.h.b16 %v322
    %v612 = vunpack.c.l.b16 %v323
    %v613 = vunpack.c.h.b16 %v323
    %v614 = vunpack.c.l.b16 %v324
    %v615 = vunpack.c.h.b16 %v324
    %v616 = vunpack.c.l.b16 %v325
    %v617 = vunpack.c.h.b16 %v325
    %v618 = vunpack.c.l.b16 %v326
    %v619 = vunpack.c.h.b16 %v326
    %v620 = vunpack.c.l.b16 %v327
    %v621 = vunpack.c.h.b16 %v327
    %v622 = vunpack.c.l.b16 %v328
    %v623 = vunpack.c.h.b16 %v328
    %v624 = vunpack.c.l.b16 %v329
    %v625 = vunpack.c.h.b16 %v329
    %v626 = vunpack.c.l.b16 %v330
    %v627 = vunpack.c.h.b16 %v330
    %v628 = vunpack.c.l.b16 %v331
    %v629 = vunpack.c.h.b16 %v331
    %v630 = vunpack.c.l.b16 %v332
    %v631 = vunpack.c.h.b16 %v332
    %v632 = vunpack.c.l.b16 %v333
    %v633 = vunpack.c.h.b16 %v333
    %v634 = vunpack.c.l.b16 %v334
    %v635 = vunpack.c.h.b16 %v334
    %v636 = vunpack.c.l.b16 %v335
    %v637 = vunpack.c.h.b16 %v335
    %v638 = vunpack.c.l.b16 %v336
    %v639 = vunpack.c.h.b16 %v336
    %v640 = vunpack.c.l.b16 %v337
    %v641 = vunpack.c.h.b16 %v337
    %v642 = vunpack.c.l.b16 %v338
    %v643 = vunpack.c.h.b16 %v338
    %v644 = vunpack.c.l.b16 %v339
    %v645 = vunpack.c.h.b16 %v339
    %v646 = vunpack.c.l.b16 %v340
    %v647 = vunpack.c.h.b16 %v340
    %v648 = vunpack.c.l.b16 %v341
    %v649 = vunpack.c.h.b16 %v341
    %v650 = vunpack.c.l.b16 %v342
    %v651 = vunpack.c.h.b16 %v342
    %v652 = vunpack.c.l.b16 %v343
    %v653 = vunpack.c.h.b16 %v343
    %v654 = vunpack.c.l.b16 %v344
    %v655 = vunpack.c.h.b16 %v344
    %v656 = vunpack.c.l.b16 %v345
    %v657 = vunpack.c.h.b16 %v345
    %v658 = vunpack.c.l.b16 %v346
    %v659 = vunpack.c.h.b16 %v346
    %v660 = vunpack.c.l.b16 %v347
    %v661 = vunpack.c.h.b16 %v347
    %v662 = vunpack.c.l.b16 %v348
    %v663 = vunpack.c.h.b16 %v348
    %v664 = vunpack.c.l.b16 %v349
    %v665 = vunpack.c.h.b16 %v349
    %v666 = vunpack.c.l.b16 %v350
    %v667 = vunpack.c.h.b16 %v350
    %v668 = vunpack.c.l.b16 %v351
    %v669 = vunpack.c.h.b16 %v351
    %v670 = vunpack.c.l.b16 %v352
    %v671 = vunpack.c.h.b16 %v352
    %v672 = vunpack.c.l.b16 %v353
    %v673 = vunpack.c.h.b16 %v353
    %v674 = vunpack.c.l.b16 %v354
    %v675 = vunpack.c.h.b16 %v354
    %v676 = vunpack.c.l.b16 %v355
    %v677 = vunpack.c.h.b16 %v355
    %v678 = vunpack.c.l.b16 %v356
    %v679 = vunpack.c.h.b16 %v356
    %v680 = vunpack.c.l.b16 %v357
    %v681 = vunpack.c.h.b16 %v357
    %v682 = vunpack.c.l.b16 %v358
    %v683 = vunpack.c.h.b16 %v358
    %v684 = vunpack.c.l.b16 %v359
    %v685 = vunpack.c.h.b16 %v359
    %v686 = vunpack.c.l.b16 %v360
    %v687 = vunpack.c.h.b16 %v360
    %v688 = vunpack.c.l.b16 %v361
    %v689 = vunpack.c.h.b16 %v361
    %v690 = vunpack.c.l.b16 %v362
    %v691 = vunpack.c.h.b16 %v362
    %v692 = vunpack.c.l.b16 %v363
    %v693 = vunpack.c.h.b16 %v363
    %v694 = vunpack.c.l.b16 %v364
    %v695 = vunpack.c.h.b16 %v364
    %v696 = vunpack.c.l.b16 %v365
    %v697 = vunpack.c.h.b16 %v365
    %v698 = vunpack.c.l.b16 %v366
    %v699 = vunpack.c.h.b16 %v366
    %v700 = vunpack.c.l.b16 %v367
    %v701 = vunpack.c.h.b16 %v367
    %v702 = vunpack.c.l.b16 %v368
    %v703 = vunpack.c.h.b16 %v368
    %v704 = vunpack.c.l.b16 %v369
    %v705 = vunpack.c.h.b16 %v369
    %v706 = vunpack.c.l.b16 %v370
    %v707 = vunpack.c.h.b16 %v370
    %v708 = vunpack.c.l.b16 %v371
    %v709 = vunpack.c.h.b16 %v371
    %v710 = vunpack.c.l.b16 %v372
    %v711 = vunpack.c.h.b16 %v372
    %v712 = vunpack.c.l.b16 %v373
    %v713 = vunpack.c.h.b16 %v373
    %v714 = vunpack.c.l.b16 %v374
    %v715 = vunpack.c.h.b16 %v374
    %v716 = vunpack.c.l.b16 %v375
    %v717 = vunpack.c.h.b16 %v375
    %v718 = vunpack.c.l.b16 %v376
    %v719 = vunpack.c.h.b16 %v376
    %v720 = vunpack.c.l.b16 %v377
    %v721 = vunpack.c.h.b16 %v377
    %v722 = vunpack.c.l.b16 %v378
    %v723 = vunpack.c.h.b16 %v378
    %v724 = vunpack.c.l.b16 %v379
    %v725 = vunpack.c.h.b16 %v379
    %v726 = vunpack.c.l.b16 %v380
    %v727 = vunpack.c.h.b16 %v380
    %v728 = vunpack.c.l.b16 %v381
    %v729 = vunpack.c.h.b16 %v381
    %v730 = vunpack.c.l.b16 %v382
    %v731 = vunpack.c.h.b16 %v382
    %v732 = vunpack.c.l.b16 %v383
    %v733 = vunpack.c.h.b16 %v383
    %v734 = vunpack.c.l.b16 %v384
    %v735 = vunpack.c.h.b16 %v384
    %v736 = vunpack.c.l.b16 %v385
    %v737 = vunpack.c.h.b16 %v385
    %v738 = vunpack.c.l.b16 %v386
    %v739 = vunpack.c.h.b16 %v386
    %v740 = vunpack.c.l.b16 %v387
    %v741 = vunpack.c.h.b16 %v387
    %v742 = vunpack.c.l.b16 %v388
    %v743 = vunpack.c.h.b16 %v388
    %v744 = vunpack.c.l.b16 %v389
    %v745 = vunpack.c.h.b16 %v389
    %v746 = vunpack.c.l.b16 %v390
    %v747 = vunpack.c.h.b16 %v390
    %v748 = vunpack.c.l.b16 %v391
    %v749 = vunpack.c.h.b16 %v391
    %v750 = vunpack.c.l.b16 %v392
    %v751 = vunpack.c.h.b16 %v392
    %v752 = vunpack.c.l.b16 %v393
    %v753 = vunpack.c.h.b16 %v393
    %v754 = vunpack.c.l.b16 %v394
    %v755 = vunpack.c.h.b16 %v394
    %v756 = vunpack.c.l.b16 %v395
    %v757 = vunpack.c.h.b16 %v395
    %v758 = vunpack.c.l.b16 %v396
    %v759 = vunpack.c.h.b16 %v396
    %v760 = vunpack.c.l.b16 %v397
    %v761 = vunpack.c.h.b16 %v397
    %v762 = vunpack.c.l.b16 %v398
    %v763 = vunpack.c.h.b16 %v398
    %v764 = vunpack.c.l.b16 %v399
    %v765 = vunpack.c.h.b16 %v399
    %v766 = vunpack.c.l.b16 %v400
    %v767 = vunpack.c.h.b16 %v400
    %v768 = vunpack.c.l.b16 %v401
    %v769 = vunpack.c.h.b16 %v401
    %v770 = vunpack.c.l.b16 %v402
    %v771 = vunpack.c.h.b16 %v402
    %v772 = vunpack.c.l.b16 %v403
    %v773 = vunpack.c.h.b16 %v403
    %v774 = vunpack.c.l.b16 %v404
    %v775 = vunpack.c.h.b16 %v404
    %v776 = vunpack.c.l.b16 %v405
    %v777 = vunpack.c.h.b16 %v405
    %v778 = vunpack.c.l.b16 %v406
    %v779 = vunpack.c.h.b16 %v406
    %v780 = vunpack.c.l.b16 %v407
    %v781 = vunpack.c.h.b16 %v407
    %v782 = vunpack.c.l.b16 %v408
    %v783 = vunpack.c.h.b16 %v408
    %v784 = vunpack.c.l.b16 %v409
    %v785 = vunpack.c.h.b16 %v409
    %v786 = vunpack.c.l.b16 %v410
    %v787 = vunpack.c.h.b16 %v410
    %v788 = vunpack.c.l.b16 %v411
    %v789 = vunpack.c.h.b16 %v411
    %v790 = vunpack.c.l.b16 %v412
    %v791 = vunpack.c.h.b16 %v412
    %v792 = vunpack.c.l.b16 %v413
    %v793 = vunpack.c.h.b16 %v413
    %v794 = vunpack.c.l.b16 %v414
    %v795 = vunpack.c.h.b16 %v414
    %v796 = vunpack.c.l.b16 %v415
    %v797 = vunpack.c.h.b16 %v415
    %v798 = vunpack.c.l.b16 %v416
    %v799 = vunpack.c.h.b16 %v416
    %v800 = vunpack.c.l.b16 %v417
    %v801 = vunpack.c.h.b16 %v417
    %v802 = vpack.c.b16 %v550, %v546
    %v803 = vpack.c.b16 %v551, %v547
    %v804 = vpack.c.b16 %v552, %v548
    %v805 = vpack.c.b16 %v553, %v549
    %v806 = vpack.c.b16 %v558, %v554
    %v807 = vpack.c.b16 %v559, %v555
    %v808 = vpack.c.b16 %v560, %v556
    %v809 = vpack.c.b16 %v561, %v557
    %v810 = vpack.c.b16 %v566, %v562
    %v811 = vpack.c.b16 %v567, %v563
    %v812 = vpack.c.b16 %v568, %v564
    %v813 = vpack.c.b16 %v569, %v565
    %v814 = vpack.c.b16 %v574, %v570
    %v815 = vpack.c.b16 %v575, %v571
    %v816 = vpack.c.b16 %v576, %v572
    %v817 = vpack.c.b16 %v577, %v573
    %v818 = vpack.c.b16 %v582, %v578
    %v819 = vpack.c.b16 %v583, %v579
    %v820 = vpack.c.b16 %v584, %v580
    %v821 = vpack.c.b16 %v585, %v581
    %v822 = vpack.c.b16 %v590, %v586
    %v823 = vpack.c.b16 %v591, %v587
    %v824 = vpack.c.b16 %v592, %v588
    %v825 = vpack.c.b16 %v593, %v589
    %v826 = vpack.c.b16 %v598, %v594
    %v827 = vpack.c.b16 %v599, %v595
    %v828 = vpack.c.b16 %v600, %v596
    %v829 = vpack.c.b16 %v601, %v597
    %v830 = vpack.c.b16 %v606, %v602
    %v831 = vpack.c.b16 %v607, %v603
    %v832 = vpack.c.b16 %v608, %v604
    %v833 = vpack.c.b16 %v609, %v605
    %v834 = vpack.c.b16 %v614, %v610
    %v835 = vpack.c.b16 %v615, %v611
    %v836 = vpack.c.b16 %v616, %v612
    %v837 = vpack.c.b16 %v617, %v613
    %v838 = vpack.c.b16 %v622, %v618
    %v839 = vpack.c.b16 %v623, %v619
    %v840 = vpack.c.b16 %v624, %v620
    %v841 = vpack.c.b16 %v625, %v621
    %v842 = vpack.c.b16 %v630, %v626
    %v843 = vpack.c.b16 %v631, %v627
    %v844 = vpack.c.b16 %v632, %v628
    %v845 = vpack.c.b16 %v633, %v629
    %v846 = vpack.c.b16 %v638, %v634
    %v847 = vpack.c.b16 %v639, %v635
    %v848 = vpack.c.b16 %v640, %v636
    %v849 = vpack.c.b16 %v641, %v637
    %v850 = vpack.c.b16 %v646, %v642
    %v851 = vpack.c.b16 %v647, %v643
    %v852 = vpack.c.b16 %v648, %v644
    %v853 = vpack.c.b16 %v649, %v645
    %v854 = vpack.c.b16 %v654, %v650
    %v855 = vpack.c.b16 %v655, %v651
    %v856 = vpack.c.b16 %v656, %v652
    %v857 = vpack.c.b16 %v657, %v653
    %v858 = vpack.c.b16 %v662, %v658
    %v859 = vpack.c.b16 %v663, %v659
    %v860 = vpack.c.b16 %v664, %v660
    %v861 = vpack.c.b16 %v665, %v661
    %v862 = vpack.c.b16 %v670, %v666
    %v863 = vpack.c.b16 %v671, %v667
    %v864 = vpack.c.b16 %v672, %v668
    %v865 = vpack.c.b16 %v673, %v669
    %v866 = vpack.c.b16 %v678, %v674
    %v867 = vpack.c.b16 %v679, %v675
    %v868 = vpack.c.b16 %v680, %v676
    %v869 = vpack.c.b16 %v681, %v677
    %v870 = vpack.c.b16 %v686, %v682
    %v871 = vpack.c.b16 %v687, %v683
    %v872 = vpack.c.b16 %v688, %v684
    %v873 = vpack.c.b16 %v689, %v685
    %v874 = vpack.c.b16 %v694, %v690
    %v875 = vpack.c.b16 %v695, %v691
    %v876 = vpack.c.b16 %v696, %v692
    %v877 = vpack.c.b16 %v697, %v693
    %v878 = vpack.c.b16 %v702, %v698
    %v879 = vpack.c.b16 %v703, %v699
    %v880 = vpack.c.b16 %v704, %v700
    %v881 = vpack.c.b16 %v705, %v701
    %v882 = vpack.c.b16 %v710, %v706
    %v883 = vpack.c.b16 %v711, %v707
    %v884 = vpack.c.b16 %v712, %v708
    %v885 = vpack.c.b16 %v713, %v709
    %v886 = vpack.c.b16 %v718, %v714
    %v887 = vpack.c.b16 %v719, %v715
    %v888 = vpack.c.b16 %v720, %v716
    %v889 = vpack.c.b16 %v721, %v717
    %v890 = vpack.c.b16 %v726, %v722
    %v891 = vpack.c.b16 %v727, %v723
    %v892 = vpack.c.b16 %v728, %v724
    %v893 = vpack.c.b16 %v729, %v725
    %v894 = vpack.c.b16 %v734, %v730
    %v895 = vpack.c.b16 %v735, %v731
    %v896 = vpack.c.b16 %v736, %v732
    %v897 = vpack.c.b16 %v737, %v733
    %v898 = vpack.c.b16 %v742, %v738
    %v899 = vpack.c.b16 %v743, %v739
    %v900 = vpack.c.b16 %v744, %v740
    %v901 = vpack.c.b16 %v745, %v741
    %v902 = vpack.c.b16 %v750, %v746
    %v903 = vpack.c.b16 %v751, %v747
    %v904 = vpack.c.b16 %v752, %v748
    %v905 = vpack.c.b16 %v753, %v749
    %v906 = vpack.c.b16 %v758, %v754
    %v907 = vpack.c.b16 %v759, %v755
    %v908 = vpack.c.b16 %v760, %v756
    %v909 = vpack.c.b16 %v761, %v757
    %v910 = vpack.c.b16 %v766, %v762
    %v911 = vpack.c.b16 %v767, %v763
    %v912 = vpack.c.b16 %v768, %v764
    %v913 = vpack.c.b16 %v769, %v765
    %v914 = vpack.c.b16 %v774, %v770
    %v915 = vpack.c.b16 %v775, %v771
    %v916 = vpack.c.b16 %v776, %v772
    %v917 = vpack.c.b16 %v777, %v773
    %v918 = vpack.c.b16 %v782, %v778
    %v919 = vpack.c.b16 %v783, %v779
    %v920 = vpack.c.b16 %v784, %v780
    %v921 = vpack.c.b16 %v785, %v781
    %v922 = vpack.c.b16 %v790, %v786
    %v923 = vpack.c.b16 %v791, %v787
    %v924 = vpack.c.b16 %v792, %v788
    %v925 = vpack.c.b16 %v793, %v789
    %v926 = vpack.c.b16 %v798, %v794
    %v927 = vpack.c.b16 %v799, %v795
    %v928 = vpack.c.b16 %v800, %v796
    %v929 = vpack.c.b16 %v801, %v797
    %1058 = vmatprep.subr.bf16.mxu0 %v803
    %1059 = vmatpush1.bf16.msra.mxu0 %v802
    %1060 = vmatprep.subr.bf16.mxu0 %v807
    %1061 = vmatpush1.bf16.msra.mxu0 %v806
    %1062 = vmatprep.subr.bf16.mxu0 %v811
    %1063 = vmatpush1.bf16.msra.mxu0 %v810
    %1064 = vmatprep.subr.bf16.mxu0 %v815
    %1065 = vmatpush1.bf16.msra.mxu0 %v814
    %1066 = vmatprep.subr.bf16.mxu0 %v819
    %1067 = vmatpush1.bf16.msra.mxu0 %v818
    %1068 = vmatprep.subr.bf16.mxu0 %v823
    %1069 = vmatpush1.bf16.msra.mxu0 %v822
    %1070 = vmatprep.subr.bf16.mxu0 %v827
    %1071 = vmatpush1.bf16.msra.mxu0 %v826
    %1072 = vmatprep.subr.bf16.mxu0 %v831
    %1073 = vmatpush1.bf16.msra.mxu0 %v830
    %1074 = vmatprep.subr.bf16.mxu0 %v835
    %1075 = vmatpush1.bf16.msra.mxu0 %v834
    %1076 = vmatprep.subr.bf16.mxu0 %v839
    %1077 = vmatpush1.bf16.msra.mxu0 %v838
    %1078 = vmatprep.subr.bf16.mxu0 %v843
    %1079 = vmatpush1.bf16.msra.mxu0 %v842
    %1080 = vmatprep.subr.bf16.mxu0 %v847
    %1081 = vmatpush1.bf16.msra.mxu0 %v846
    %1082 = vmatprep.subr.bf16.mxu0 %v851
    %1083 = vmatpush1.bf16.msra.mxu0 %v850
    %1084 = vmatprep.subr.bf16.mxu0 %v855
    %1085 = vmatpush1.bf16.msra.mxu0 %v854
    %1086 = vmatprep.subr.bf16.mxu0 %v859
    %1087 = vmatpush1.bf16.msra.mxu0 %v858
    %1088 = vmatprep.subr.bf16.mxu0 %v863
    %1089 = vmatpush1.bf16.msra.mxu0 %v862
    %1090 = vmatprep.mubr.bf16.mxu0 %v287
    %1091 = vmatmul.mubr.bf16.gmra.mrb[0].mxu0 %v286
    %v1092 = vpop.f32.mrb[0].mxu0
    %v1093 = vadd.f32 0.0, %v1092
    %v1094 = vpop.f32.mrb[0].mxu0
    %v1095 = vadd.f32 0.0, %v1094
    %v1096 = vpop.f32.mrb[0].mxu0
    %v1097 = vpop.f32.mrb[0].mxu0
    %1098 = vdwg.mxu0
    %1099 = vmatprep.subr.bf16.mxu0 %v867
    %1100 = vmatpush1.bf16.msra.mxu0 %v866
    %1101 = vmatprep.subr.bf16.mxu0 %v871
    %1102 = vmatpush1.bf16.msra.mxu0 %v870
    %1103 = vmatprep.subr.bf16.mxu0 %v875
    %1104 = vmatpush1.bf16.msra.mxu0 %v874
    %1105 = vmatprep.subr.bf16.mxu0 %v879
    %1106 = vmatpush1.bf16.msra.mxu0 %v878
    %1107 = vmatprep.subr.bf16.mxu0 %v883
    %1108 = vmatpush1.bf16.msra.mxu0 %v882
    %1109 = vmatprep.subr.bf16.mxu0 %v887
    %1110 = vmatpush1.bf16.msra.mxu0 %v886
    %1111 = vmatprep.subr.bf16.mxu0 %v891
    %1112 = vmatpush1.bf16.msra.mxu0 %v890
    %1113 = vmatprep.subr.bf16.mxu0 %v895
    %1114 = vmatpush1.bf16.msra.mxu0 %v894
    %1115 = vmatprep.subr.bf16.mxu0 %v899
    %1116 = vmatpush1.bf16.msra.mxu0 %v898
    %1117 = vmatprep.subr.bf16.mxu0 %v903
    %1118 = vmatpush1.bf16.msra.mxu0 %v902
    %1119 = vmatprep.subr.bf16.mxu0 %v907
    %1120 = vmatpush1.bf16.msra.mxu0 %v906
    %1121 = vmatprep.subr.bf16.mxu0 %v911
    %1122 = vmatpush1.bf16.msra.mxu0 %v910
    %1123 = vmatprep.subr.bf16.mxu0 %v915
    %1124 = vmatpush1.bf16.msra.mxu0 %v914
    %1125 = vmatprep.subr.bf16.mxu0 %v919
    %1126 = vmatpush1.bf16.msra.mxu0 %v918
    %1127 = vmatprep.subr.bf16.mxu0 %v923
    %1128 = vmatpush1.bf16.msra.mxu0 %v922
    %1129 = vmatprep.subr.bf16.mxu0 %v927
    %1130 = vmatpush1.bf16.msra.mxu0 %v926
    %1131 = vmatprep.mubr.bf16.mxu0 %v289
    %1132 = vmatmul.mubr.bf16.gmra.mrb[0].mxu0 %v288
    %v1133 = vpop.f32.mrb[0].mxu0
    %v1134 = vadd.f32 %v1093, %v1133
    %v1135 = vpop.f32.mrb[0].mxu0
    %v1136 = vadd.f32 %v1095, %v1135
    %v1137 = vpop.f32.mrb[0].mxu0
    %v1138 = vpop.f32.mrb[0].mxu0
    %1139 = vdwg.mxu0
    %1140 = vmatprep.subr.bf16.mxu0 %v805
    %1141 = vmatpush1.bf16.msra.mxu0 %v804
    %1142 = vmatprep.subr.bf16.mxu0 %v809
    %1143 = vmatpush1.bf16.msra.mxu0 %v808
    %1144 = vmatprep.subr.bf16.mxu0 %v813
    %1145 = vmatpush1.bf16.msra.mxu0 %v812
    %1146 = vmatprep.subr.bf16.mxu0 %v817
    %1147 = vmatpush1.bf16.msra.mxu0 %v816
    %1148 = vmatprep.subr.bf16.mxu0 %v821
    %1149 = vmatpush1.bf16.msra.mxu0 %v820
    %1150 = vmatprep.subr.bf16.mxu0 %v825
    %1151 = vmatpush1.bf16.msra.mxu0 %v824
    %1152 = vmatprep.subr.bf16.mxu0 %v829
    %1153 = vmatpush1.bf16.msra.mxu0 %v828
    %1154 = vmatprep.subr.bf16.mxu0 %v833
    %1155 = vmatpush1.bf16.msra.mxu0 %v832
    %1156 = vmatprep.subr.bf16.mxu0 %v837
    %1157 = vmatpush1.bf16.msra.mxu0 %v836
    %1158 = vmatprep.subr.bf16.mxu0 %v841
    %1159 = vmatpush1.bf16.msra.mxu0 %v840
    %1160 = vmatprep.subr.bf16.mxu0 %v845
    %1161 = vmatpush1.bf16.msra.mxu0 %v844
    %1162 = vmatprep.subr.bf16.mxu0 %v849
    %1163 = vmatpush1.bf16.msra.mxu0 %v848
    %1164 = vmatprep.subr.bf16.mxu0 %v853
    %1165 = vmatpush1.bf16.msra.mxu0 %v852
    %1166 = vmatprep.subr.bf16.mxu0 %v857
    %1167 = vmatpush1.bf16.msra.mxu0 %v856
    %1168 = vmatprep.subr.bf16.mxu0 %v861
    %1169 = vmatpush1.bf16.msra.mxu0 %v860
    %1170 = vmatprep.subr.bf16.mxu0 %v865
    %1171 = vmatpush1.bf16.msra.mxu0 %v864
    %1172 = vmatprep.mubr.bf16.mxu0 %v287
    %1173 = vmatmul.mubr.bf16.gmra.mrb[0].mxu0 %v286
    %v1174 = vpop.f32.mrb[0].mxu0
    %v1175 = vadd.f32 0.0, %v1174
    %v1176 = vpop.f32.mrb[0].mxu0
    %v1177 = vadd.f32 0.0, %v1176
    %v1178 = vpop.f32.mrb[0].mxu0
    %v1179 = vpop.f32.mrb[0].mxu0
    %1180 = vdwg.mxu0
    %1181 = vmatprep.subr.bf16.mxu0 %v869
    %1182 = vmatpush1.bf16.msra.mxu0 %v868
    %1183 = vmatprep.subr.bf16.mxu0 %v873
    %1184 = vmatpush1.bf16.msra.mxu0 %v872
    %1185 = vmatprep.subr.bf16.mxu0 %v877
    %1186 = vmatpush1.bf16.msra.mxu0 %v876
    %1187 = vmatprep.subr.bf16.mxu0 %v881
    %1188 = vmatpush1.bf16.msra.mxu0 %v880
    %1189 = vmatprep.subr.bf16.mxu0 %v885
    %1190 = vmatpush1.bf16.msra.mxu0 %v884
    %1191 = vmatprep.subr.bf16.mxu0 %v889
    %1192 = vmatpush1.bf16.msra.mxu0 %v888
    %1193 = vmatprep.subr.bf16.mxu0 %v893
    %1194 = vmatpush1.bf16.msra.mxu0 %v892
    %1195 = vmatprep.subr.bf16.mxu0 %v897
    %1196 = vmatpush1.bf16.msra.mxu0 %v896
    %1197 = vmatprep.subr.bf16.mxu0 %v901
    %1198 = vmatpush1.bf16.msra.mxu0 %v900
    %1199 = vmatprep.subr.bf16.mxu0 %v905
    %1200 = vmatpush1.bf16.msra.mxu0 %v904
    %1201 = vmatprep.subr.bf16.mxu0 %v909
    %1202 = vmatpush1.bf16.msra.mxu0 %v908
    %1203 = vmatprep.subr.bf16.mxu0 %v913
    %1204 = vmatpush1.bf16.msra.mxu0 %v912
    %1205 = vmatprep.subr.bf16.mxu0 %v917
    %1206 = vmatpush1.bf16.msra.mxu0 %v916
    %1207 = vmatprep.subr.bf16.mxu0 %v921
    %1208 = vmatpush1.bf16.msra.mxu0 %v920
    %1209 = vmatprep.subr.bf16.mxu0 %v925
    %1210 = vmatpush1.bf16.msra.mxu0 %v924
    %1211 = vmatprep.subr.bf16.mxu0 %v929
    %1212 = vmatpush1.bf16.msra.mxu0 %v928
    %1213 = vmatprep.mubr.bf16.mxu0 %v289
    %1214 = vmatmul.mubr.bf16.gmra.mrb[0].mxu0 %v288
    %v1215 = vpop.f32.mrb[0].mxu0
    %v1216 = vadd.f32 %v1175, %v1215
    %v1217 = vpop.f32.mrb[0].mxu0
    %v1218 = vadd.f32 %v1177, %v1217
    %v1219 = vpop.f32.mrb[0].mxu0
    %v1220 = vpop.f32.mrb[0].mxu0
    %1221 = vdwg.mxu0
    %v1222 = vpack.c.bf16 %v1134, %v1134
    %v1223 = vpack.c.bf16 %v1136, %v1136
    %v1224 = vpack.c.bf16 %v1216, %v1216
    %v1225 = vpack.c.bf16 %v1218, %v1218
    %v1226 = vld [vmem:[%s4] sm:$0xf]
    %v1229 = vunpack.c.l.s4 1966171168
    %v1230 = vunpack.c.0.s8 %v1229
    %v1231 = vlaneseq
    %v1232 = vshrl.u32 %v1231, 7
    %v1233 = vsub.s32 %v1230, %v1232
    %v1234 = vrot.slane %v1226, %v1233
    %v1235 = vcombine.high %v1234, %v1234
    %v1237 = vunpack.c.l.s4 1966171168
    %v1238 = vunpack.c.0.s8 %v1237
    %v1239 = vlaneseq
    %v1240 = vshrl.u32 %v1239, 7
    %v1241 = vsub.s32 %v1238, %v1240
    %v1242 = vrot.slane %v1234, %v1241
    %v1244 = vunpack.c.l.s4 1966171168
    %v1245 = vunpack.c.0.s8 %v1244
    %v1246 = vlaneseq
    %v1247 = vshrl.u32 %v1246, 7
    %v1248 = vsub.s32 %v1245, %v1247
    %v1249 = vrot.slane %v1235, %v1248
    %v1250 = vcombine.high %v1242, %v1242
    %v1251 = vcombine.high %v1249, %v1249
    %v1253 = vpack.i.b16 %v1242, %v1242
    %v1255 = vlaneseq
    %v1256 = vshrl.u32 %v1255, 7
    %v1257 = vsub.s32 0, %v1256
    %v1258 = vrot.slane %v1253, %v1257
    %v1260 = vpack.i.b16 %v1249, %v1249
    %v1262 = vlaneseq
    %v1263 = vshrl.u32 %v1262, 7
    %v1264 = vsub.s32 0, %v1263
    %v1265 = vrot.slane %v1260, %v1264
    %v1267 = vpack.i.b16 %v1250, %v1250
    %v1269 = vlaneseq
    %v1270 = vshrl.u32 %v1269, 7
    %v1271 = vsub.s32 0, %v1270
    %v1272 = vrot.slane %v1267, %v1271
    %v1274 = vpack.i.b16 %v1251, %v1251
    %v1276 = vlaneseq
    %v1277 = vshrl.u32 %v1276, 7
    %v1278 = vsub.s32 0, %v1277
    %v1279 = vrot.slane %v1274, %v1278
    %v1280 = vadd.bf16 %v1222, %v1258
    %v1281 = vadd.bf16 %v1223, %v1265
    %v1282 = vadd.bf16 %v1224, %v1272
    %v1283 = vadd.bf16 %v1225, %v1279
    %v1284 = vmax.bf16 %v1280, 0
    %v1285 = vmax.bf16 %v1281, 0
    %v1286 = vmax.bf16 %v1282, 0
    %v1287 = vmax.bf16 %v1283, 0
    %v1288 = vld [vmem:[#allocation6] sm:$0xff]
    %v1289 = vld [vmem:[#allocation6 + $0x8] sm:$0xff]
    %v1290 = vld [vmem:[#allocation6 + $0x10] sm:$0xff]
    %v1291 = vld [vmem:[#allocation6 + $0x18] sm:$0xff]
    %v1292 = vld [vmem:[#allocation6 + $0x20] sm:$0xff]
    %v1293 = vld [vmem:[#allocation6 + $0x28] sm:$0xff]
    %v1294 = vld [vmem:[#allocation6 + $0x30] sm:$0xff]
    %v1295 = vld [vmem:[#allocation6 + $0x38] sm:$0xff]
    %v1296 = vld [vmem:[#allocation6 + $0x40] sm:$0xff]
    %v1297 = vld [vmem:[#allocation6 + $0x48] sm:$0xff]
    %v1298 = vld [vmem:[#allocation6 + $0x50] sm:$0xff]
    %v1299 = vld [vmem:[#allocation6 + $0x58] sm:$0xff]
    %v1300 = vld [vmem:[#allocation6 + $0x60] sm:$0xff]
    %v1301 = vld [vmem:[#allocation6 + $0x68] sm:$0xff]
    %v1302 = vld [vmem:[#allocation6 + $0x70] sm:$0xff]
    %v1303 = vld [vmem:[#allocation6 + $0x78] sm:$0xff]
    %v1304 = vld [vmem:[#allocation6 + $0x80] sm:$0xff]
    %v1305 = vld [vmem:[#allocation6 + $0x88] sm:$0xff]
    %v1306 = vld [vmem:[#allocation6 + $0x90] sm:$0xff]
    %v1307 = vld [vmem:[#allocation6 + $0x98] sm:$0xff]
    %v1308 = vld [vmem:[#allocation6 + $0xa0] sm:$0xff]
    %v1309 = vld [vmem:[#allocation6 + $0xa8] sm:$0xff]
    %v1310 = vld [vmem:[#allocation6 + $0xb0] sm:$0xff]
    %v1311 = vld [vmem:[#allocation6 + $0xb8] sm:$0xff]
    %v1312 = vld [vmem:[#allocation6 + $0xc0] sm:$0xff]
    %v1313 = vld [vmem:[#allocation6 + $0xc8] sm:$0xff]
    %v1314 = vld [vmem:[#allocation6 + $0xd0] sm:$0xff]
    %v1315 = vld [vmem:[#allocation6 + $0xd8] sm:$0xff]
    %v1316 = vld [vmem:[#allocation6 + $0xe0] sm:$0xff]
    %v1317 = vld [vmem:[#allocation6 + $0xe8] sm:$0xff]
    %v1318 = vld [vmem:[#allocation6 + $0xf0] sm:$0xff]
    %v1319 = vld [vmem:[#allocation6 + $0xf8] sm:$0xff]
    %v1320 = vld [vmem:[#allocation6 + $0x100] sm:$0xff]
    %v1321 = vld [vmem:[#allocation6 + $0x108] sm:$0xff]
    %v1322 = vld [vmem:[#allocation6 + $0x110] sm:$0xff]
    %v1323 = vld [vmem:[#allocation6 + $0x118] sm:$0xff]
    %v1324 = vld [vmem:[#allocation6 + $0x120] sm:$0xff]
    %v1325 = vld [vmem:[#allocation6 + $0x128] sm:$0xff]
    %v1326 = vld [vmem:[#allocation6 + $0x130] sm:$0xff]
    %v1327 = vld [vmem:[#allocation6 + $0x138] sm:$0xff]
    %v1328 = vld [vmem:[#allocation6 + $0x140] sm:$0xff]
    %v1329 = vld [vmem:[#allocation6 + $0x148] sm:$0xff]
    %v1330 = vld [vmem:[#allocation6 + $0x150] sm:$0xff]
    %v1331 = vld [vmem:[#allocation6 + $0x158] sm:$0xff]
    %v1332 = vld [vmem:[#allocation6 + $0x160] sm:$0xff]
    %v1333 = vld [vmem:[#allocation6 + $0x168] sm:$0xff]
    %v1334 = vld [vmem:[#allocation6 + $0x170] sm:$0xff]
    %v1335 = vld [vmem:[#allocation6 + $0x178] sm:$0xff]
    %v1336 = vld [vmem:[#allocation6 + $0x180] sm:$0xff]
    %v1337 = vld [vmem:[#allocation6 + $0x188] sm:$0xff]
    %v1338 = vld [vmem:[#allocation6 + $0x190] sm:$0xff]
    %v1339 = vld [vmem:[#allocation6 + $0x198] sm:$0xff]
    %v1340 = vld [vmem:[#allocation6 + $0x1a0] sm:$0xff]
    %v1341 = vld [vmem:[#allocation6 + $0x1a8] sm:$0xff]
    %v1342 = vld [vmem:[#allocation6 + $0x1b0] sm:$0xff]
    %v1343 = vld [vmem:[#allocation6 + $0x1b8] sm:$0xff]
    %v1344 = vld [vmem:[#allocation6 + $0x1c0] sm:$0xff]
    %v1345 = vld [vmem:[#allocation6 + $0x1c8] sm:$0xff]
    %v1346 = vld [vmem:[#allocation6 + $0x1d0] sm:$0xff]
    %v1347 = vld [vmem:[#allocation6 + $0x1d8] sm:$0xff]
    %v1348 = vld [vmem:[#allocation6 + $0x1e0] sm:$0xff]
    %v1349 = vld [vmem:[#allocation6 + $0x1e8] sm:$0xff]
    %v1350 = vld [vmem:[#allocation6 + $0x1f0] sm:$0xff]
    %v1351 = vld [vmem:[#allocation6 + $0x1f8] sm:$0xff]
    %v1352 = vld [vmem:[#allocation6 + $0x200] sm:$0xff]
    %v1353 = vld [vmem:[#allocation6 + $0x208] sm:$0xff]
    %v1354 = vld [vmem:[#allocation6 + $0x210] sm:$0xff]
    %v1355 = vld [vmem:[#allocation6 + $0x218] sm:$0xff]
    %v1356 = vld [vmem:[#allocation6 + $0x220] sm:$0xff]
    %v1357 = vld [vmem:[#allocation6 + $0x228] sm:$0xff]
    %v1358 = vld [vmem:[#allocation6 + $0x230] sm:$0xff]
    %v1359 = vld [vmem:[#allocation6 + $0x238] sm:$0xff]
    %v1360 = vld [vmem:[#allocation6 + $0x240] sm:$0xff]
    %v1361 = vld [vmem:[#allocation6 + $0x248] sm:$0xff]
    %v1362 = vld [vmem:[#allocation6 + $0x250] sm:$0xff]
    %v1363 = vld [vmem:[#allocation6 + $0x258] sm:$0xff]
    %v1364 = vld [vmem:[#allocation6 + $0x260] sm:$0xff]
    %v1365 = vld [vmem:[#allocation6 + $0x268] sm:$0xff]
    %v1366 = vld [vmem:[#allocation6 + $0x270] sm:$0xff]
    %v1367 = vld [vmem:[#allocation6 + $0x278] sm:$0xff]
    %v1368 = vld [vmem:[#allocation6 + $0x280] sm:$0xff]
    %v1369 = vld [vmem:[#allocation6 + $0x288] sm:$0xff]
    %v1370 = vld [vmem:[#allocation6 + $0x290] sm:$0xff]
    %v1371 = vld [vmem:[#allocation6 + $0x298] sm:$0xff]
    %v1372 = vld [vmem:[#allocation6 + $0x2a0] sm:$0xff]
    %v1373 = vld [vmem:[#allocation6 + $0x2a8] sm:$0xff]
    %v1374 = vld [vmem:[#allocation6 + $0x2b0] sm:$0xff]
    %v1375 = vld [vmem:[#allocation6 + $0x2b8] sm:$0xff]
    %v1376 = vld [vmem:[#allocation6 + $0x2c0] sm:$0xff]
    %v1377 = vld [vmem:[#allocation6 + $0x2c8] sm:$0xff]
    %v1378 = vld [vmem:[#allocation6 + $0x2d0] sm:$0xff]
    %v1379 = vld [vmem:[#allocation6 + $0x2d8] sm:$0xff]
    %v1380 = vld [vmem:[#allocation6 + $0x2e0] sm:$0xff]
    %v1381 = vld [vmem:[#allocation6 + $0x2e8] sm:$0xff]
    %v1382 = vld [vmem:[#allocation6 + $0x2f0] sm:$0xff]
    %v1383 = vld [vmem:[#allocation6 + $0x2f8] sm:$0xff]
    %v1384 = vld [vmem:[#allocation6 + $0x300] sm:$0xff]
    %v1385 = vld [vmem:[#allocation6 + $0x308] sm:$0xff]
    %v1386 = vld [vmem:[#allocation6 + $0x310] sm:$0xff]
    %v1387 = vld [vmem:[#allocation6 + $0x318] sm:$0xff]
    %v1388 = vld [vmem:[#allocation6 + $0x320] sm:$0xff]
    %v1389 = vld [vmem:[#allocation6 + $0x328] sm:$0xff]
    %v1390 = vld [vmem:[#allocation6 + $0x330] sm:$0xff]
    %v1391 = vld [vmem:[#allocation6 + $0x338] sm:$0xff]
    %v1392 = vld [vmem:[#allocation6 + $0x340] sm:$0xff]
    %v1393 = vld [vmem:[#allocation6 + $0x348] sm:$0xff]
    %v1394 = vld [vmem:[#allocation6 + $0x350] sm:$0xff]
    %v1395 = vld [vmem:[#allocation6 + $0x358] sm:$0xff]
    %v1396 = vld [vmem:[#allocation6 + $0x360] sm:$0xff]
    %v1397 = vld [vmem:[#allocation6 + $0x368] sm:$0xff]
    %v1398 = vld [vmem:[#allocation6 + $0x370] sm:$0xff]
    %v1399 = vld [vmem:[#allocation6 + $0x378] sm:$0xff]
    %v1400 = vld [vmem:[#allocation6 + $0x380] sm:$0xff]
    %v1401 = vld [vmem:[#allocation6 + $0x388] sm:$0xff]
    %v1402 = vld [vmem:[#allocation6 + $0x390] sm:$0xff]
    %v1403 = vld [vmem:[#allocation6 + $0x398] sm:$0xff]
    %v1404 = vld [vmem:[#allocation6 + $0x3a0] sm:$0xff]
    %v1405 = vld [vmem:[#allocation6 + $0x3a8] sm:$0xff]
    %v1406 = vld [vmem:[#allocation6 + $0x3b0] sm:$0xff]
    %v1407 = vld [vmem:[#allocation6 + $0x3b8] sm:$0xff]
    %v1408 = vld [vmem:[#allocation6 + $0x3c0] sm:$0xff]
    %v1409 = vld [vmem:[#allocation6 + $0x3c8] sm:$0xff]
    %v1410 = vld [vmem:[#allocation6 + $0x3d0] sm:$0xff]
    %v1411 = vld [vmem:[#allocation6 + $0x3d8] sm:$0xff]
    %v1412 = vld [vmem:[#allocation6 + $0x3e0] sm:$0xff]
    %v1413 = vld [vmem:[#allocation6 + $0x3e8] sm:$0xff]
    %v1414 = vld [vmem:[#allocation6 + $0x3f0] sm:$0xff]
    %v1415 = vld [vmem:[#allocation6 + $0x3f8] sm:$0xff]
    %v1544 = vunpack.c.l.b16 %v1288
    %v1545 = vunpack.c.h.b16 %v1288
    %v1546 = vunpack.c.l.b16 %v1289
    %v1547 = vunpack.c.h.b16 %v1289
    %v1548 = vunpack.c.l.b16 %v1290
    %v1549 = vunpack.c.h.b16 %v1290
    %v1550 = vunpack.c.l.b16 %v1291
    %v1551 = vunpack.c.h.b16 %v1291
    %v1552 = vunpack.c.l.b16 %v1292
    %v1553 = vunpack.c.h.b16 %v1292
    %v1554 = vunpack.c.l.b16 %v1293
    %v1555 = vunpack.c.h.b16 %v1293
    %v1556 = vunpack.c.l.b16 %v1294
    %v1557 = vunpack.c.h.b16 %v1294
    %v1558 = vunpack.c.l.b16 %v1295
    %v1559 = vunpack.c.h.b16 %v1295
    %v1560 = vunpack.c.l.b16 %v1296
    %v1561 = vunpack.c.h.b16 %v1296
    %v1562 = vunpack.c.l.b16 %v1297
    %v1563 = vunpack.c.h.b16 %v1297
    %v1564 = vunpack.c.l.b16 %v1298
    %v1565 = vunpack.c.h.b16 %v1298
    %v1566 = vunpack.c.l.b16 %v1299
    %v1567 = vunpack.c.h.b16 %v1299
    %v1568 = vunpack.c.l.b16 %v1300
    %v1569 = vunpack.c.h.b16 %v1300
    %v1570 = vunpack.c.l.b16 %v1301
    %v1571 = vunpack.c.h.b16 %v1301
    %v1572 = vunpack.c.l.b16 %v1302
    %v1573 = vunpack.c.h.b16 %v1302
    %v1574 = vunpack.c.l.b16 %v1303
    %v1575 = vunpack.c.h.b16 %v1303
    %v1576 = vunpack.c.l.b16 %v1304
    %v1577 = vunpack.c.h.b16 %v1304
    %v1578 = vunpack.c.l.b16 %v1305
    %v1579 = vunpack.c.h.b16 %v1305
    %v1580 = vunpack.c.l.b16 %v1306
    %v1581 = vunpack.c.h.b16 %v1306
    %v1582 = vunpack.c.l.b16 %v1307
    %v1583 = vunpack.c.h.b16 %v1307
    %v1584 = vunpack.c.l.b16 %v1308
    %v1585 = vunpack.c.h.b16 %v1308
    %v1586 = vunpack.c.l.b16 %v1309
    %v1587 = vunpack.c.h.b16 %v1309
    %v1588 = vunpack.c.l.b16 %v1310
    %v1589 = vunpack.c.h.b16 %v1310
    %v1590 = vunpack.c.l.b16 %v1311
    %v1591 = vunpack.c.h.b16 %v1311
    %v1592 = vunpack.c.l.b16 %v1312
    %v1593 = vunpack.c.h.b16 %v1312
    %v1594 = vunpack.c.l.b16 %v1313
    %v1595 = vunpack.c.h.b16 %v1313
    %v1596 = vunpack.c.l.b16 %v1314
    %v1597 = vunpack.c.h.b16 %v1314
    %v1598 = vunpack.c.l.b16 %v1315
    %v1599 = vunpack.c.h.b16 %v1315
    %v1600 = vunpack.c.l.b16 %v1316
    %v1601 = vunpack.c.h.b16 %v1316
    %v1602 = vunpack.c.l.b16 %v1317
    %v1603 = vunpack.c.h.b16 %v1317
    %v1604 = vunpack.c.l.b16 %v1318
    %v1605 = vunpack.c.h.b16 %v1318
    %v1606 = vunpack.c.l.b16 %v1319
    %v1607 = vunpack.c.h.b16 %v1319
    %v1608 = vunpack.c.l.b16 %v1320
    %v1609 = vunpack.c.h.b16 %v1320
    %v1610 = vunpack.c.l.b16 %v1321
    %v1611 = vunpack.c.h.b16 %v1321
    %v1612 = vunpack.c.l.b16 %v1322
    %v1613 = vunpack.c.h.b16 %v1322
    %v1614 = vunpack.c.l.b16 %v1323
    %v1615 = vunpack.c.h.b16 %v1323
    %v1616 = vunpack.c.l.b16 %v1324
    %v1617 = vunpack.c.h.b16 %v1324
    %v1618 = vunpack.c.l.b16 %v1325
    %v1619 = vunpack.c.h.b16 %v1325
    %v1620 = vunpack.c.l.b16 %v1326
    %v1621 = vunpack.c.h.b16 %v1326
    %v1622 = vunpack.c.l.b16 %v1327
    %v1623 = vunpack.c.h.b16 %v1327
    %v1624 = vunpack.c.l.b16 %v1328
    %v1625 = vunpack.c.h.b16 %v1328
    %v1626 = vunpack.c.l.b16 %v1329
    %v1627 = vunpack.c.h.b16 %v1329
    %v1628 = vunpack.c.l.b16 %v1330
    %v1629 = vunpack.c.h.b16 %v1330
    %v1630 = vunpack.c.l.b16 %v1331
    %v1631 = vunpack.c.h.b16 %v1331
    %v1632 = vunpack.c.l.b16 %v1332
    %v1633 = vunpack.c.h.b16 %v1332
    %v1634 = vunpack.c.l.b16 %v1333
    %v1635 = vunpack.c.h.b16 %v1333
    %v1636 = vunpack.c.l.b16 %v1334
    %v1637 = vunpack.c.h.b16 %v1334
    %v1638 = vunpack.c.l.b16 %v1335
    %v1639 = vunpack.c.h.b16 %v1335
    %v1640 = vunpack.c.l.b16 %v1336
    %v1641 = vunpack.c.h.b16 %v1336
    %v1642 = vunpack.c.l.b16 %v1337
    %v1643 = vunpack.c.h.b16 %v1337
    %v1644 = vunpack.c.l.b16 %v1338
    %v1645 = vunpack.c.h.b16 %v1338
    %v1646 = vunpack.c.l.b16 %v1339
    %v1647 = vunpack.c.h.b16 %v1339
    %v1648 = vunpack.c.l.b16 %v1340
    %v1649 = vunpack.c.h.b16 %v1340
    %v1650 = vunpack.c.l.b16 %v1341
    %v1651 = vunpack.c.h.b16 %v1341
    %v1652 = vunpack.c.l.b16 %v1342
    %v1653 = vunpack.c.h.b16 %v1342
    %v1654 = vunpack.c.l.b16 %v1343
    %v1655 = vunpack.c.h.b16 %v1343
    %v1656 = vunpack.c.l.b16 %v1344
    %v1657 = vunpack.c.h.b16 %v1344
    %v1658 = vunpack.c.l.b16 %v1345
    %v1659 = vunpack.c.h.b16 %v1345
    %v1660 = vunpack.c.l.b16 %v1346
    %v1661 = vunpack.c.h.b16 %v1346
    %v1662 = vunpack.c.l.b16 %v1347
    %v1663 = vunpack.c.h.b16 %v1347
    %v1664 = vunpack.c.l.b16 %v1348
    %v1665 = vunpack.c.h.b16 %v1348
    %v1666 = vunpack.c.l.b16 %v1349
    %v1667 = vunpack.c.h.b16 %v1349
    %v1668 = vunpack.c.l.b16 %v1350
    %v1669 = vunpack.c.h.b16 %v1350
    %v1670 = vunpack.c.l.b16 %v1351
    %v1671 = vunpack.c.h.b16 %v1351
    %v1672 = vunpack.c.l.b16 %v1352
    %v1673 = vunpack.c.h.b16 %v1352
    %v1674 = vunpack.c.l.b16 %v1353
    %v1675 = vunpack.c.h.b16 %v1353
    %v1676 = vunpack.c.l.b16 %v1354
    %v1677 = vunpack.c.h.b16 %v1354
    %v1678 = vunpack.c.l.b16 %v1355
    %v1679 = vunpack.c.h.b16 %v1355
    %v1680 = vunpack.c.l.b16 %v1356
    %v1681 = vunpack.c.h.b16 %v1356
    %v1682 = vunpack.c.l.b16 %v1357
    %v1683 = vunpack.c.h.b16 %v1357
    %v1684 = vunpack.c.l.b16 %v1358
    %v1685 = vunpack.c.h.b16 %v1358
    %v1686 = vunpack.c.l.b16 %v1359
    %v1687 = vunpack.c.h.b16 %v1359
    %v1688 = vunpack.c.l.b16 %v1360
    %v1689 = vunpack.c.h.b16 %v1360
    %v1690 = vunpack.c.l.b16 %v1361
    %v1691 = vunpack.c.h.b16 %v1361
    %v1692 = vunpack.c.l.b16 %v1362
    %v1693 = vunpack.c.h.b16 %v1362
    %v1694 = vunpack.c.l.b16 %v1363
    %v1695 = vunpack.c.h.b16 %v1363
    %v1696 = vunpack.c.l.b16 %v1364
    %v1697 = vunpack.c.h.b16 %v1364
    %v1698 = vunpack.c.l.b16 %v1365
    %v1699 = vunpack.c.h.b16 %v1365
    %v1700 = vunpack.c.l.b16 %v1366
    %v1701 = vunpack.c.h.b16 %v1366
    %v1702 = vunpack.c.l.b16 %v1367
    %v1703 = vunpack.c.h.b16 %v1367
    %v1704 = vunpack.c.l.b16 %v1368
    %v1705 = vunpack.c.h.b16 %v1368
    %v1706 = vunpack.c.l.b16 %v1369
    %v1707 = vunpack.c.h.b16 %v1369
    %v1708 = vunpack.c.l.b16 %v1370
    %v1709 = vunpack.c.h.b16 %v1370
    %v1710 = vunpack.c.l.b16 %v1371
    %v1711 = vunpack.c.h.b16 %v1371
    %v1712 = vunpack.c.l.b16 %v1372
    %v1713 = vunpack.c.h.b16 %v1372
    %v1714 = vunpack.c.l.b16 %v1373
    %v1715 = vunpack.c.h.b16 %v1373
    %v1716 = vunpack.c.l.b16 %v1374
    %v1717 = vunpack.c.h.b16 %v1374
    %v1718 = vunpack.c.l.b16 %v1375
    %v1719 = vunpack.c.h.b16 %v1375
    %v1720 = vunpack.c.l.b16 %v1376
    %v1721 = vunpack.c.h.b16 %v1376
    %v1722 = vunpack.c.l.b16 %v1377
    %v1723 = vunpack.c.h.b16 %v1377
    %v1724 = vunpack.c.l.b16 %v1378
    %v1725 = vunpack.c.h.b16 %v1378
    %v1726 = vunpack.c.l.b16 %v1379
    %v1727 = vunpack.c.h.b16 %v1379
    %v1728 = vunpack.c.l.b16 %v1380
    %v1729 = vunpack.c.h.b16 %v1380
    %v1730 = vunpack.c.l.b16 %v1381
    %v1731 = vunpack.c.h.b16 %v1381
    %v1732 = vunpack.c.l.b16 %v1382
    %v1733 = vunpack.c.h.b16 %v1382
    %v1734 = vunpack.c.l.b16 %v1383
    %v1735 = vunpack.c.h.b16 %v1383
    %v1736 = vunpack.c.l.b16 %v1384
    %v1737 = vunpack.c.h.b16 %v1384
    %v1738 = vunpack.c.l.b16 %v1385
    %v1739 = vunpack.c.h.b16 %v1385
    %v1740 = vunpack.c.l.b16 %v1386
    %v1741 = vunpack.c.h.b16 %v1386
    %v1742 = vunpack.c.l.b16 %v1387
    %v1743 = vunpack.c.h.b16 %v1387
    %v1744 = vunpack.c.l.b16 %v1388
    %v1745 = vunpack.c.h.b16 %v1388
    %v1746 = vunpack.c.l.b16 %v1389
    %v1747 = vunpack.c.h.b16 %v1389
    %v1748 = vunpack.c.l.b16 %v1390
    %v1749 = vunpack.c.h.b16 %v1390
    %v1750 = vunpack.c.l.b16 %v1391
    %v1751 = vunpack.c.h.b16 %v1391
    %v1752 = vunpack.c.l.b16 %v1392
    %v1753 = vunpack.c.h.b16 %v1392
    %v1754 = vunpack.c.l.b16 %v1393
    %v1755 = vunpack.c.h.b16 %v1393
    %v1756 = vunpack.c.l.b16 %v1394
    %v1757 = vunpack.c.h.b16 %v1394
    %v1758 = vunpack.c.l.b16 %v1395
    %v1759 = vunpack.c.h.b16 %v1395
    %v1760 = vunpack.c.l.b16 %v1396
    %v1761 = vunpack.c.h.b16 %v1396
    %v1762 = vunpack.c.l.b16 %v1397
    %v1763 = vunpack.c.h.b16 %v1397
    %v1764 = vunpack.c.l.b16 %v1398
    %v1765 = vunpack.c.h.b16 %v1398
    %v1766 = vunpack.c.l.b16 %v1399
    %v1767 = vunpack.c.h.b16 %v1399
    %v1768 = vunpack.c.l.b16 %v1400
    %v1769 = vunpack.c.h.b16 %v1400
    %v1770 = vunpack.c.l.b16 %v1401
    %v1771 = vunpack.c.h.b16 %v1401
    %v1772 = vunpack.c.l.b16 %v1402
    %v1773 = vunpack.c.h.b16 %v1402
    %v1774 = vunpack.c.l.b16 %v1403
    %v1775 = vunpack.c.h.b16 %v1403
    %v1776 = vunpack.c.l.b16 %v1404
    %v1777 = vunpack.c.h.b16 %v1404
    %v1778 = vunpack.c.l.b16 %v1405
    %v1779 = vunpack.c.h.b16 %v1405
    %v1780 = vunpack.c.l.b16 %v1406
    %v1781 = vunpack.c.h.b16 %v1406
    %v1782 = vunpack.c.l.b16 %v1407
    %v1783 = vunpack.c.h.b16 %v1407
    %v1784 = vunpack.c.l.b16 %v1408
    %v1785 = vunpack.c.h.b16 %v1408
    %v1786 = vunpack.c.l.b16 %v1409
    %v1787 = vunpack.c.h.b16 %v1409
    %v1788 = vunpack.c.l.b16 %v1410
    %v1789 = vunpack.c.h.b16 %v1410
    %v1790 = vunpack.c.l.b16 %v1411
    %v1791 = vunpack.c.h.b16 %v1411
    %v1792 = vunpack.c.l.b16 %v1412
    %v1793 = vunpack.c.h.b16 %v1412
    %v1794 = vunpack.c.l.b16 %v1413
    %v1795 = vunpack.c.h.b16 %v1413
    %v1796 = vunpack.c.l.b16 %v1414
    %v1797 = vunpack.c.h.b16 %v1414
    %v1798 = vunpack.c.l.b16 %v1415
    %v1799 = vunpack.c.h.b16 %v1415
    %v1800 = vpack.c.b16 %v1548, %v1544
    %v1801 = vpack.c.b16 %v1549, %v1545
    %v1802 = vpack.c.b16 %v1550, %v1546
    %v1803 = vpack.c.b16 %v1551, %v1547
    %v1804 = vpack.c.b16 %v1556, %v1552
    %v1805 = vpack.c.b16 %v1557, %v1553
    %v1806 = vpack.c.b16 %v1558, %v1554
    %v1807 = vpack.c.b16 %v1559, %v1555
    %v1808 = vpack.c.b16 %v1564, %v1560
    %v1809 = vpack.c.b16 %v1565, %v1561
    %v1810 = vpack.c.b16 %v1566, %v1562
    %v1811 = vpack.c.b16 %v1567, %v1563
    %v1812 = vpack.c.b16 %v1572, %v1568
    %v1813 = vpack.c.b16 %v1573, %v1569
    %v1814 = vpack.c.b16 %v1574, %v1570
    %v1815 = vpack.c.b16 %v1575, %v1571
    %v1816 = vpack.c.b16 %v1580, %v1576
    %v1817 = vpack.c.b16 %v1581, %v1577
    %v1818 = vpack.c.b16 %v1582, %v1578
    %v1819 = vpack.c.b16 %v1583, %v1579
    %v1820 = vpack.c.b16 %v1588, %v1584
    %v1821 = vpack.c.b16 %v1589, %v1585
    %v1822 = vpack.c.b16 %v1590, %v1586
    %v1823 = vpack.c.b16 %v1591, %v1587
    %v1824 = vpack.c.b16 %v1596, %v1592
    %v1825 = vpack.c.b16 %v1597, %v1593
    %v1826 = vpack.c.b16 %v1598, %v1594
    %v1827 = vpack.c.b16 %v1599, %v1595
    %v1828 = vpack.c.b16 %v1604, %v1600
    %v1829 = vpack.c.b16 %v1605, %v1601
    %v1830 = vpack.c.b16 %v1606, %v1602
    %v1831 = vpack.c.b16 %v1607, %v1603
    %v1832 = vpack.c.b16 %v1612, %v1608
    %v1833 = vpack.c.b16 %v1613, %v1609
    %v1834 = vpack.c.b16 %v1614, %v1610
    %v1835 = vpack.c.b16 %v1615, %v1611
    %v1836 = vpack.c.b16 %v1620, %v1616
    %v1837 = vpack.c.b16 %v1621, %v1617
    %v1838 = vpack.c.b16 %v1622, %v1618
    %v1839 = vpack.c.b16 %v1623, %v1619
    %v1840 = vpack.c.b16 %v1628, %v1624
    %v1841 = vpack.c.b16 %v1629, %v1625
    %v1842 = vpack.c.b16 %v1630, %v1626
    %v1843 = vpack.c.b16 %v1631, %v1627
    %v1844 = vpack.c.b16 %v1636, %v1632
    %v1845 = vpack.c.b16 %v1637, %v1633
    %v1846 = vpack.c.b16 %v1638, %v1634
    %v1847 = vpack.c.b16 %v1639, %v1635
    %v1848 = vpack.c.b16 %v1644, %v1640
    %v1849 = vpack.c.b16 %v1645, %v1641
    %v1850 = vpack.c.b16 %v1646, %v1642
    %v1851 = vpack.c.b16 %v1647, %v1643
    %v1852 = vpack.c.b16 %v1652, %v1648
    %v1853 = vpack.c.b16 %v1653, %v1649
    %v1854 = vpack.c.b16 %v1654, %v1650
    %v1855 = vpack.c.b16 %v1655, %v1651
    %v1856 = vpack.c.b16 %v1660, %v1656
    %v1857 = vpack.c.b16 %v1661, %v1657
    %v1858 = vpack.c.b16 %v1662, %v1658
    %v1859 = vpack.c.b16 %v1663, %v1659
    %v1860 = vpack.c.b16 %v1668, %v1664
    %v1861 = vpack.c.b16 %v1669, %v1665
    %v1862 = vpack.c.b16 %v1670, %v1666
    %v1863 = vpack.c.b16 %v1671, %v1667
    %v1864 = vpack.c.b16 %v1676, %v1672
    %v1865 = vpack.c.b16 %v1677, %v1673
    %v1866 = vpack.c.b16 %v1678, %v1674
    %v1867 = vpack.c.b16 %v1679, %v1675
    %v1868 = vpack.c.b16 %v1684, %v1680
    %v1869 = vpack.c.b16 %v1685, %v1681
    %v1870 = vpack.c.b16 %v1686, %v1682
    %v1871 = vpack.c.b16 %v1687, %v1683
    %v1872 = vpack.c.b16 %v1692, %v1688
    %v1873 = vpack.c.b16 %v1693, %v1689
    %v1874 = vpack.c.b16 %v1694, %v1690
    %v1875 = vpack.c.b16 %v1695, %v1691
    %v1876 = vpack.c.b16 %v1700, %v1696
    %v1877 = vpack.c.b16 %v1701, %v1697
    %v1878 = vpack.c.b16 %v1702, %v1698
    %v1879 = vpack.c.b16 %v1703, %v1699
    %v1880 = vpack.c.b16 %v1708, %v1704
    %v1881 = vpack.c.b16 %v1709, %v1705
    %v1882 = vpack.c.b16 %v1710, %v1706
    %v1883 = vpack.c.b16 %v1711, %v1707
    %v1884 = vpack.c.b16 %v1716, %v1712
    %v1885 = vpack.c.b16 %v1717, %v1713
    %v1886 = vpack.c.b16 %v1718, %v1714
    %v1887 = vpack.c.b16 %v1719, %v1715
    %v1888 = vpack.c.b16 %v1724, %v1720
    %v1889 = vpack.c.b16 %v1725, %v1721
    %v1890 = vpack.c.b16 %v1726, %v1722
    %v1891 = vpack.c.b16 %v1727, %v1723
    %v1892 = vpack.c.b16 %v1732, %v1728
    %v1893 = vpack.c.b16 %v1733, %v1729
    %v1894 = vpack.c.b16 %v1734, %v1730
    %v1895 = vpack.c.b16 %v1735, %v1731
    %v1896 = vpack.c.b16 %v1740, %v1736
    %v1897 = vpack.c.b16 %v1741, %v1737
    %v1898 = vpack.c.b16 %v1742, %v1738
    %v1899 = vpack.c.b16 %v1743, %v1739
    %v1900 = vpack.c.b16 %v1748, %v1744
    %v1901 = vpack.c.b16 %v1749, %v1745
    %v1902 = vpack.c.b16 %v1750, %v1746
    %v1903 = vpack.c.b16 %v1751, %v1747
    %v1904 = vpack.c.b16 %v1756, %v1752
    %v1905 = vpack.c.b16 %v1757, %v1753
    %v1906 = vpack.c.b16 %v1758, %v1754
    %v1907 = vpack.c.b16 %v1759, %v1755
    %v1908 = vpack.c.b16 %v1764, %v1760
    %v1909 = vpack.c.b16 %v1765, %v1761
    %v1910 = vpack.c.b16 %v1766, %v1762
    %v1911 = vpack.c.b16 %v1767, %v1763
    %v1912 = vpack.c.b16 %v1772, %v1768
    %v1913 = vpack.c.b16 %v1773, %v1769
    %v1914 = vpack.c.b16 %v1774, %v1770
    %v1915 = vpack.c.b16 %v1775, %v1771
    %v1916 = vpack.c.b16 %v1780, %v1776
    %v1917 = vpack.c.b16 %v1781, %v1777
    %v1918 = vpack.c.b16 %v1782, %v1778
    %v1919 = vpack.c.b16 %v1783, %v1779
    %v1920 = vpack.c.b16 %v1788, %v1784
    %v1921 = vpack.c.b16 %v1789, %v1785
    %v1922 = vpack.c.b16 %v1790, %v1786
    %v1923 = vpack.c.b16 %v1791, %v1787
    %v1924 = vpack.c.b16 %v1796, %v1792
    %v1925 = vpack.c.b16 %v1797, %v1793
    %v1926 = vpack.c.b16 %v1798, %v1794
    %v1927 = vpack.c.b16 %v1799, %v1795
    %2056 = vmatprep.subr.bf16.mxu0 %v1801
    %2057 = vmatpush1.bf16.msra.mxu0 %v1800
    %2058 = vmatprep.subr.bf16.mxu0 %v1805
    %2059 = vmatpush1.bf16.msra.mxu0 %v1804
    %2060 = vmatprep.subr.bf16.mxu0 %v1809
    %2061 = vmatpush1.bf16.msra.mxu0 %v1808
    %2062 = vmatprep.subr.bf16.mxu0 %v1813
    %2063 = vmatpush1.bf16.msra.mxu0 %v1812
    %2064 = vmatprep.subr.bf16.mxu0 %v1817
    %2065 = vmatpush1.bf16.msra.mxu0 %v1816
    %2066 = vmatprep.subr.bf16.mxu0 %v1821
    %2067 = vmatpush1.bf16.msra.mxu0 %v1820
    %2068 = vmatprep.subr.bf16.mxu0 %v1825
    %2069 = vmatpush1.bf16.msra.mxu0 %v1824
    %2070 = vmatprep.subr.bf16.mxu0 %v1829
    %2071 = vmatpush1.bf16.msra.mxu0 %v1828
    %2072 = vmatprep.subr.bf16.mxu0 %v1833
    %2073 = vmatpush1.bf16.msra.mxu0 %v1832
    %2074 = vmatprep.subr.bf16.mxu0 %v1837
    %2075 = vmatpush1.bf16.msra.mxu0 %v1836
    %2076 = vmatprep.subr.bf16.mxu0 %v1841
    %2077 = vmatpush1.bf16.msra.mxu0 %v1840
    %2078 = vmatprep.subr.bf16.mxu0 %v1845
    %2079 = vmatpush1.bf16.msra.mxu0 %v1844
    %2080 = vmatprep.subr.bf16.mxu0 %v1849
    %2081 = vmatpush1.bf16.msra.mxu0 %v1848
    %2082 = vmatprep.subr.bf16.mxu0 %v1853
    %2083 = vmatpush1.bf16.msra.mxu0 %v1852
    %2084 = vmatprep.subr.bf16.mxu0 %v1857
    %2085 = vmatpush1.bf16.msra.mxu0 %v1856
    %2086 = vmatprep.subr.bf16.mxu0 %v1861
    %2087 = vmatpush1.bf16.msra.mxu0 %v1860
    %2088 = vmatprep.mubr.bf16.mxu0 %v1285
    %2089 = vmatmul.mubr.bf16.gmra.mrb[0].mxu0 %v1284
    %v2090 = vpop.f32.mrb[0].mxu0
    %v2091 = vadd.f32 0.0, %v2090
    %v2092 = vpop.f32.mrb[0].mxu0
    %v2093 = vadd.f32 0.0, %v2092
    %v2094 = vpop.f32.mrb[0].mxu0
    %v2095 = vpop.f32.mrb[0].mxu0
    %2096 = vdwg.mxu0
    %2097 = vmatprep.subr.bf16.mxu0 %v1865
    %2098 = vmatpush1.bf16.msra.mxu0 %v1864
    %2099 = vmatprep.subr.bf16.mxu0 %v1869
    %2100 = vmatpush1.bf16.msra.mxu0 %v1868
    %2101 = vmatprep.subr.bf16.mxu0 %v1873
    %2102 = vmatpush1.bf16.msra.mxu0 %v1872
    %2103 = vmatprep.subr.bf16.mxu0 %v1877
    %2104 = vmatpush1.bf16.msra.mxu0 %v1876
    %2105 = vmatprep.subr.bf16.mxu0 %v1881
    %2106 = vmatpush1.bf16.msra.mxu0 %v1880
    %2107 = vmatprep.subr.bf16.mxu0 %v1885
    %2108 = vmatpush1.bf16.msra.mxu0 %v1884
    %2109 = vmatprep.subr.bf16.mxu0 %v1889
    %2110 = vmatpush1.bf16.msra.mxu0 %v1888
    %2111 = vmatprep.subr.bf16.mxu0 %v1893
    %2112 = vmatpush1.bf16.msra.mxu0 %v1892
    %2113 = vmatprep.subr.bf16.mxu0 %v1897
    %2114 = vmatpush1.bf16.msra.mxu0 %v1896
    %2115 = vmatprep.subr.bf16.mxu0 %v1901
    %2116 = vmatpush1.bf16.msra.mxu0 %v1900
    %2117 = vmatprep.subr.bf16.mxu0 %v1905
    %2118 = vmatpush1.bf16.msra.mxu0 %v1904
    %2119 = vmatprep.subr.bf16.mxu0 %v1909
    %2120 = vmatpush1.bf16.msra.mxu0 %v1908
    %2121 = vmatprep.subr.bf16.mxu0 %v1913
    %2122 = vmatpush1.bf16.msra.mxu0 %v1912
    %2123 = vmatprep.subr.bf16.mxu0 %v1917
    %2124 = vmatpush1.bf16.msra.mxu0 %v1916
    %2125 = vmatprep.subr.bf16.mxu0 %v1921
    %2126 = vmatpush1.bf16.msra.mxu0 %v1920
    %2127 = vmatprep.subr.bf16.mxu0 %v1925
    %2128 = vmatpush1.bf16.msra.mxu0 %v1924
    %2129 = vmatprep.mubr.bf16.mxu0 %v1287
    %2130 = vmatmul.mubr.bf16.gmra.mrb[0].mxu0 %v1286
    %v2131 = vpop.f32.mrb[0].mxu0
    %v2132 = vadd.f32 %v2091, %v2131
    %v2133 = vpop.f32.mrb[0].mxu0
    %v2134 = vadd.f32 %v2093, %v2133
    %v2135 = vpop.f32.mrb[0].mxu0
    %v2136 = vpop.f32.mrb[0].mxu0
    %2137 = vdwg.mxu0
    %2138 = vmatprep.subr.bf16.mxu0 %v1803
    %2139 = vmatpush1.bf16.msra.mxu0 %v1802
    %2140 = vmatprep.subr.bf16.mxu0 %v1807
    %2141 = vmatpush1.bf16.msra.mxu0 %v1806
    %2142 = vmatprep.subr.bf16.mxu0 %v1811
    %2143 = vmatpush1.bf16.msra.mxu0 %v1810
    %2144 = vmatprep.subr.bf16.mxu0 %v1815
    %2145 = vmatpush1.bf16.msra.mxu0 %v1814
    %2146 = vmatprep.subr.bf16.mxu0 %v1819
    %2147 = vmatpush1.bf16.msra.mxu0 %v1818
    %2148 = vmatprep.subr.bf16.mxu0 %v1823
    %2149 = vmatpush1.bf16.msra.mxu0 %v1822
    %2150 = vmatprep.subr.bf16.mxu0 %v1827
    %2151 = vmatpush1.bf16.msra.mxu0 %v1826
    %2152 = vmatprep.subr.bf16.mxu0 %v1831
    %2153 = vmatpush1.bf16.msra.mxu0 %v1830
    %2154 = vmatprep.subr.bf16.mxu0 %v1835
    %2155 = vmatpush1.bf16.msra.mxu0 %v1834
    %2156 = vmatprep.subr.bf16.mxu0 %v1839
    %2157 = vmatpush1.bf16.msra.mxu0 %v1838
    %2158 = vmatprep.subr.bf16.mxu0 %v1843
    %2159 = vmatpush1.bf16.msra.mxu0 %v1842
    %2160 = vmatprep.subr.bf16.mxu0 %v1847
    %2161 = vmatpush1.bf16.msra.mxu0 %v1846
    %2162 = vmatprep.subr.bf16.mxu0 %v1851
    %2163 = vmatpush1.bf16.msra.mxu0 %v1850
    %2164 = vmatprep.subr.bf16.mxu0 %v1855
    %2165 = vmatpush1.bf16.msra.mxu0 %v1854
    %2166 = vmatprep.subr.bf16.mxu0 %v1859
    %2167 = vmatpush1.bf16.msra.mxu0 %v1858
    %2168 = vmatprep.subr.bf16.mxu0 %v1863
    %2169 = vmatpush1.bf16.msra.mxu0 %v1862
    %2170 = vmatprep.mubr.bf16.mxu0 %v1285
    %2171 = vmatmul.mubr.bf16.gmra.mrb[0].mxu0 %v1284
    %v2172 = vpop.f32.mrb[0].mxu0
    %v2173 = vadd.f32 0.0, %v2172
    %v2174 = vpop.f32.mrb[0].mxu0
    %v2175 = vadd.f32 0.0, %v2174
    %v2176 = vpop.f32.mrb[0].mxu0
    %v2177 = vpop.f32.mrb[0].mxu0
    %2178 = vdwg.mxu0
    %2179 = vmatprep.subr.bf16.mxu0 %v1867
    %2180 = vmatpush1.bf16.msra.mxu0 %v1866
    %2181 = vmatprep.subr.bf16.mxu0 %v1871
    %2182 = vmatpush1.bf16.msra.mxu0 %v1870
    %2183 = vmatprep.subr.bf16.mxu0 %v1875
    %2184 = vmatpush1.bf16.msra.mxu0 %v1874
    %2185 = vmatprep.subr.bf16.mxu0 %v1879
    %2186 = vmatpush1.bf16.msra.mxu0 %v1878
    %2187 = vmatprep.subr.bf16.mxu0 %v1883
    %2188 = vmatpush1.bf16.msra.mxu0 %v1882
    %2189 = vmatprep.subr.bf16.mxu0 %v1887
    %2190 = vmatpush1.bf16.msra.mxu0 %v1886
    %2191 = vmatprep.subr.bf16.mxu0 %v1891
    %2192 = vmatpush1.bf16.msra.mxu0 %v1890
    %2193 = vmatprep.subr.bf16.mxu0 %v1895
    %2194 = vmatpush1.bf16.msra.mxu0 %v1894
    %2195 = vmatprep.subr.bf16.mxu0 %v1899
    %2196 = vmatpush1.bf16.msra.mxu0 %v1898
    %2197 = vmatprep.subr.bf16.mxu0 %v1903
    %2198 = vmatpush1.bf16.msra.mxu0 %v1902
    %2199 = vmatprep.subr.bf16.mxu0 %v1907
    %2200 = vmatpush1.bf16.msra.mxu0 %v1906
    %2201 = vmatprep.subr.bf16.mxu0 %v1911
    %2202 = vmatpush1.bf16.msra.mxu0 %v1910
    %2203 = vmatprep.subr.bf16.mxu0 %v1915
    %2204 = vmatpush1.bf16.msra.mxu0 %v1914
    %2205 = vmatprep.subr.bf16.mxu0 %v1919
    %2206 = vmatpush1.bf16.msra.mxu0 %v1918
    %2207 = vmatprep.subr.bf16.mxu0 %v1923
    %2208 = vmatpush1.bf16.msra.mxu0 %v1922
    %2209 = vmatprep.subr.bf16.mxu0 %v1927
    %2210 = vmatpush1.bf16.msra.mxu0 %v1926
    %2211 = vmatprep.mubr.bf16.mxu0 %v1287
    %2212 = vmatmul.mubr.bf16.gmra.mrb[0].mxu0 %v1286
    %v2213 = vpop.f32.mrb[0].mxu0
    %v2214 = vadd.f32 %v2173, %v2213
    %v2215 = vpop.f32.mrb[0].mxu0
    %v2216 = vadd.f32 %v2175, %v2215
    %v2217 = vpop.f32.mrb[0].mxu0
    %v2218 = vpop.f32.mrb[0].mxu0
    %2219 = vdwg.mxu0
    %v2220 = vpack.c.bf16 %v2132, %v2132
    %v2221 = vpack.c.bf16 %v2134, %v2134
    %v2222 = vpack.c.bf16 %v2214, %v2214
    %v2223 = vpack.c.bf16 %v2216, %v2216
    %v2224 = vld [vmem:[%s6] sm:$0xf]
    %v2227 = vunpack.c.l.s4 1966171168
    %v2228 = vunpack.c.0.s8 %v2227
    %v2229 = vlaneseq
    %v2230 = vshrl.u32 %v2229, 7
    %v2231 = vsub.s32 %v2228, %v2230
    %v2232 = vrot.slane %v2224, %v2231
    %v2233 = vcombine.high %v2232, %v2232
    %v2235 = vunpack.c.l.s4 1966171168
    %v2236 = vunpack.c.0.s8 %v2235
    %v2237 = vlaneseq
    %v2238 = vshrl.u32 %v2237, 7
    %v2239 = vsub.s32 %v2236, %v2238
    %v2240 = vrot.slane %v2232, %v2239
    %v2242 = vunpack.c.l.s4 1966171168
    %v2243 = vunpack.c.0.s8 %v2242
    %v2244 = vlaneseq
    %v2245 = vshrl.u32 %v2244, 7
    %v2246 = vsub.s32 %v2243, %v2245
    %v2247 = vrot.slane %v2233, %v2246
    %v2248 = vcombine.high %v2240, %v2240
    %v2249 = vcombine.high %v2247, %v2247
    %v2251 = vpack.i.b16 %v2240, %v2240
    %v2253 = vlaneseq
    %v2254 = vshrl.u32 %v2253, 7
    %v2255 = vsub.s32 0, %v2254
    %v2256 = vrot.slane %v2251, %v2255
    %v2258 = vpack.i.b16 %v2247, %v2247
    %v2260 = vlaneseq
    %v2261 = vshrl.u32 %v2260, 7
    %v2262 = vsub.s32 0, %v2261
    %v2263 = vrot.slane %v2258, %v2262
    %v2265 = vpack.i.b16 %v2248, %v2248
    %v2267 = vlaneseq
    %v2268 = vshrl.u32 %v2267, 7
    %v2269 = vsub.s32 0, %v2268
    %v2270 = vrot.slane %v2265, %v2269
    %v2272 = vpack.i.b16 %v2249, %v2249
    %v2274 = vlaneseq
    %v2275 = vshrl.u32 %v2274, 7
    %v2276 = vsub.s32 0, %v2275
    %v2277 = vrot.slane %v2272, %v2276
    %v2278 = vadd.bf16 %v2220, %v2256
    %v2279 = vadd.bf16 %v2221, %v2263
    %v2280 = vadd.bf16 %v2222, %v2270
    %v2281 = vadd.bf16 %v2223, %v2277
    %v2282 = vmax.bf16 %v2278, 0
    %v2283 = vmax.bf16 %v2279, 0
    %v2284 = vmax.bf16 %v2280, 0
    %v2285 = vmax.bf16 %v2281, 0
    %v2286 = vld [vmem:[#allocation7] sm:$0xf]
    %v2287 = vld [vmem:[#allocation7 + $0x4] sm:$0xf]
    %v2288 = vld [vmem:[#allocation7 + $0x8] sm:$0xf]
    %v2289 = vld [vmem:[#allocation7 + $0xc] sm:$0xf]
    %v2290 = vld [vmem:[#allocation7 + $0x10] sm:$0xf]
    %v2291 = vld [vmem:[#allocation7 + $0x14] sm:$0xf]
    %v2292 = vld [vmem:[#allocation7 + $0x18] sm:$0xf]
    %v2293 = vld [vmem:[#allocation7 + $0x1c] sm:$0xf]
    %v2294 = vld [vmem:[#allocation7 + $0x20] sm:$0xf]
    %v2295 = vld [vmem:[#allocation7 + $0x24] sm:$0xf]
    %v2296 = vld [vmem:[#allocation7 + $0x28] sm:$0xf]
    %v2297 = vld [vmem:[#allocation7 + $0x2c] sm:$0xf]
    %v2298 = vld [vmem:[#allocation7 + $0x30] sm:$0xf]
    %v2299 = vld [vmem:[#allocation7 + $0x34] sm:$0xf]
    %v2300 = vld [vmem:[#allocation7 + $0x38] sm:$0xf]
    %v2301 = vld [vmem:[#allocation7 + $0x3c] sm:$0xf]
    %v2302 = vld [vmem:[#allocation7 + $0x40] sm:$0xf]
    %v2303 = vld [vmem:[#allocation7 + $0x44] sm:$0xf]
    %v2304 = vld [vmem:[#allocation7 + $0x48] sm:$0xf]
    %v2305 = vld [vmem:[#allocation7 + $0x4c] sm:$0xf]
    %v2306 = vld [vmem:[#allocation7 + $0x50] sm:$0xf]
    %v2307 = vld [vmem:[#allocation7 + $0x54] sm:$0xf]
    %v2308 = vld [vmem:[#allocation7 + $0x58] sm:$0xf]
    %v2309 = vld [vmem:[#allocation7 + $0x5c] sm:$0xf]
    %v2310 = vld [vmem:[#allocation7 + $0x60] sm:$0xf]
    %v2311 = vld [vmem:[#allocation7 + $0x64] sm:$0xf]
    %v2312 = vld [vmem:[#allocation7 + $0x68] sm:$0xf]
    %v2313 = vld [vmem:[#allocation7 + $0x6c] sm:$0xf]
    %v2314 = vld [vmem:[#allocation7 + $0x70] sm:$0xf]
    %v2315 = vld [vmem:[#allocation7 + $0x74] sm:$0xf]
    %v2316 = vld [vmem:[#allocation7 + $0x78] sm:$0xf]
    %v2317 = vld [vmem:[#allocation7 + $0x7c] sm:$0xf]
    %v2318 = vld [vmem:[#allocation7 + $0x80] sm:$0xf]
    %v2319 = vld [vmem:[#allocation7 + $0x84] sm:$0xf]
    %v2320 = vld [vmem:[#allocation7 + $0x88] sm:$0xf]
    %v2321 = vld [vmem:[#allocation7 + $0x8c] sm:$0xf]
    %v2322 = vld [vmem:[#allocation7 + $0x90] sm:$0xf]
    %v2323 = vld [vmem:[#allocation7 + $0x94] sm:$0xf]
    %v2324 = vld [vmem:[#allocation7 + $0x98] sm:$0xf]
    %v2325 = vld [vmem:[#allocation7 + $0x9c] sm:$0xf]
    %v2326 = vld [vmem:[#allocation7 + $0xa0] sm:$0xf]
    %v2327 = vld [vmem:[#allocation7 + $0xa4] sm:$0xf]
    %v2328 = vld [vmem:[#allocation7 + $0xa8] sm:$0xf]
    %v2329 = vld [vmem:[#allocation7 + $0xac] sm:$0xf]
    %v2330 = vld [vmem:[#allocation7 + $0xb0] sm:$0xf]
    %v2331 = vld [vmem:[#allocation7 + $0xb4] sm:$0xf]
    %v2332 = vld [vmem:[#allocation7 + $0xb8] sm:$0xf]
    %v2333 = vld [vmem:[#allocation7 + $0xbc] sm:$0xf]
    %v2334 = vld [vmem:[#allocation7 + $0xc0] sm:$0xf]
    %v2335 = vld [vmem:[#allocation7 + $0xc4] sm:$0xf]
    %v2336 = vld [vmem:[#allocation7 + $0xc8] sm:$0xf]
    %v2337 = vld [vmem:[#allocation7 + $0xcc] sm:$0xf]
    %v2338 = vld [vmem:[#allocation7 + $0xd0] sm:$0xf]
    %v2339 = vld [vmem:[#allocation7 + $0xd4] sm:$0xf]
    %v2340 = vld [vmem:[#allocation7 + $0xd8] sm:$0xf]
    %v2341 = vld [vmem:[#allocation7 + $0xdc] sm:$0xf]
    %v2342 = vld [vmem:[#allocation7 + $0xe0] sm:$0xf]
    %v2343 = vld [vmem:[#allocation7 + $0xe4] sm:$0xf]
    %v2344 = vld [vmem:[#allocation7 + $0xe8] sm:$0xf]
    %v2345 = vld [vmem:[#allocation7 + $0xec] sm:$0xf]
    %v2346 = vld [vmem:[#allocation7 + $0xf0] sm:$0xf]
    %v2347 = vld [vmem:[#allocation7 + $0xf4] sm:$0xf]
    %v2348 = vld [vmem:[#allocation7 + $0xf8] sm:$0xf]
    %v2349 = vld [vmem:[#allocation7 + $0xfc] sm:$0xf]
    %v2350 = vld [vmem:[%s8] sm:$0x1]
    %v2352 = vlaneseq
    %v2353 = vshrl.u32 %v2352, 7
    %v2354 = vsub.s32 0, %v2353
    %v2355 = vrot.slane %v2350, %v2354
    %v2421 = vunpack.c.l.b16 %v2286
    %v2422 = vunpack.c.l.b16 %v2287
    %v2423 = vunpack.c.l.b16 %v2288
    %v2424 = vunpack.c.l.b16 %v2289
    %v2425 = vunpack.c.l.b16 %v2290
    %v2426 = vunpack.c.l.b16 %v2291
    %v2427 = vunpack.c.l.b16 %v2292
    %v2428 = vunpack.c.l.b16 %v2293
    %v2429 = vunpack.c.l.b16 %v2294
    %v2430 = vunpack.c.l.b16 %v2295
    %v2431 = vunpack.c.l.b16 %v2296
    %v2432 = vunpack.c.l.b16 %v2297
    %v2433 = vunpack.c.l.b16 %v2298
    %v2434 = vunpack.c.l.b16 %v2299
    %v2435 = vunpack.c.l.b16 %v2300
    %v2436 = vunpack.c.l.b16 %v2301
    %v2437 = vunpack.c.l.b16 %v2302
    %v2438 = vunpack.c.l.b16 %v2303
    %v2439 = vunpack.c.l.b16 %v2304
    %v2440 = vunpack.c.l.b16 %v2305
    %v2441 = vunpack.c.l.b16 %v2306
    %v2442 = vunpack.c.l.b16 %v2307
    %v2443 = vunpack.c.l.b16 %v2308
    %v2444 = vunpack.c.l.b16 %v2309
    %v2445 = vunpack.c.l.b16 %v2310
    %v2446 = vunpack.c.l.b16 %v2311
    %v2447 = vunpack.c.l.b16 %v2312
    %v2448 = vunpack.c.l.b16 %v2313
    %v2449 = vunpack.c.l.b16 %v2314
    %v2450 = vunpack.c.l.b16 %v2315
    %v2451 = vunpack.c.l.b16 %v2316
    %v2452 = vunpack.c.l.b16 %v2317
    %v2453 = vunpack.c.l.b16 %v2318
    %v2454 = vunpack.c.l.b16 %v2319
    %v2455 = vunpack.c.l.b16 %v2320
    %v2456 = vunpack.c.l.b16 %v2321
    %v2457 = vunpack.c.l.b16 %v2322
    %v2458 = vunpack.c.l.b16 %v2323
    %v2459 = vunpack.c.l.b16 %v2324
    %v2460 = vunpack.c.l.b16 %v2325
    %v2461 = vunpack.c.l.b16 %v2326
    %v2462 = vunpack.c.l.b16 %v2327
    %v2463 = vunpack.c.l.b16 %v2328
    %v2464 = vunpack.c.l.b16 %v2329
    %v2465 = vunpack.c.l.b16 %v2330
    %v2466 = vunpack.c.l.b16 %v2331
    %v2467 = vunpack.c.l.b16 %v2332
    %v2468 = vunpack.c.l.b16 %v2333
    %v2469 = vunpack.c.l.b16 %v2334
    %v2470 = vunpack.c.l.b16 %v2335
    %v2471 = vunpack.c.l.b16 %v2336
    %v2472 = vunpack.c.l.b16 %v2337
    %v2473 = vunpack.c.l.b16 %v2338
    %v2474 = vunpack.c.l.b16 %v2339
    %v2475 = vunpack.c.l.b16 %v2340
    %v2476 = vunpack.c.l.b16 %v2341
    %v2477 = vunpack.c.l.b16 %v2342
    %v2478 = vunpack.c.l.b16 %v2343
    %v2479 = vunpack.c.l.b16 %v2344
    %v2480 = vunpack.c.l.b16 %v2345
    %v2481 = vunpack.c.l.b16 %v2346
    %v2482 = vunpack.c.l.b16 %v2347
    %v2483 = vunpack.c.l.b16 %v2348
    %v2484 = vunpack.c.l.b16 %v2349
    %v2485 = vpack.c.b16 %v2422, %v2421
    %v2486 = vpack.c.b16 %v2424, %v2423
    %v2487 = vpack.c.b16 %v2426, %v2425
    %v2488 = vpack.c.b16 %v2428, %v2427
    %v2489 = vpack.c.b16 %v2430, %v2429
    %v2490 = vpack.c.b16 %v2432, %v2431
    %v2491 = vpack.c.b16 %v2434, %v2433
    %v2492 = vpack.c.b16 %v2436, %v2435
    %v2493 = vpack.c.b16 %v2438, %v2437
    %v2494 = vpack.c.b16 %v2440, %v2439
    %v2495 = vpack.c.b16 %v2442, %v2441
    %v2496 = vpack.c.b16 %v2444, %v2443
    %v2497 = vpack.c.b16 %v2446, %v2445
    %v2498 = vpack.c.b16 %v2448, %v2447
    %v2499 = vpack.c.b16 %v2450, %v2449
    %v2500 = vpack.c.b16 %v2452, %v2451
    %v2501 = vpack.c.b16 %v2454, %v2453
    %v2502 = vpack.c.b16 %v2456, %v2455
    %v2503 = vpack.c.b16 %v2458, %v2457
    %v2504 = vpack.c.b16 %v2460, %v2459
    %v2505 = vpack.c.b16 %v2462, %v2461
    %v2506 = vpack.c.b16 %v2464, %v2463
    %v2507 = vpack.c.b16 %v2466, %v2465
    %v2508 = vpack.c.b16 %v2468, %v2467
    %v2509 = vpack.c.b16 %v2470, %v2469
    %v2510 = vpack.c.b16 %v2472, %v2471
    %v2511 = vpack.c.b16 %v2474, %v2473
    %v2512 = vpack.c.b16 %v2476, %v2475
    %v2513 = vpack.c.b16 %v2478, %v2477
    %v2514 = vpack.c.b16 %v2480, %v2479
    %v2515 = vpack.c.b16 %v2482, %v2481
    %v2516 = vpack.c.b16 %v2484, %v2483
    %2549 = vmatprep.subr.bf16.mxu0 0
    %2550 = vmatpush1.bf16.msra.mxu0 %v2485
    %2551 = vmatprep.subr.bf16.mxu0 0
    %2552 = vmatpush1.bf16.msra.mxu0 %v2486
    %2553 = vmatprep.subr.bf16.mxu0 0
    %2554 = vmatpush1.bf16.msra.mxu0 %v2487
    %2555 = vmatprep.subr.bf16.mxu0 0
    %2556 = vmatpush1.bf16.msra.mxu0 %v2488
    %2557 = vmatprep.subr.bf16.mxu0 0
    %2558 = vmatpush1.bf16.msra.mxu0 %v2489
    %2559 = vmatprep.subr.bf16.mxu0 0
    %2560 = vmatpush1.bf16.msra.mxu0 %v2490
    %2561 = vmatprep.subr.bf16.mxu0 0
    %2562 = vmatpush1.bf16.msra.mxu0 %v2491
    %2563 = vmatprep.subr.bf16.mxu0 0
    %2564 = vmatpush1.bf16.msra.mxu0 %v2492
    %2565 = vmatprep.subr.bf16.mxu0 0
    %2566 = vmatpush1.bf16.msra.mxu0 %v2493
    %2567 = vmatprep.subr.bf16.mxu0 0
    %2568 = vmatpush1.bf16.msra.mxu0 %v2494
    %2569 = vmatprep.subr.bf16.mxu0 0
    %2570 = vmatpush1.bf16.msra.mxu0 %v2495
    %2571 = vmatprep.subr.bf16.mxu0 0
    %2572 = vmatpush1.bf16.msra.mxu0 %v2496
    %2573 = vmatprep.subr.bf16.mxu0 0
    %2574 = vmatpush1.bf16.msra.mxu0 %v2497
    %2575 = vmatprep.subr.bf16.mxu0 0
    %2576 = vmatpush1.bf16.msra.mxu0 %v2498
    %2577 = vmatprep.subr.bf16.mxu0 0
    %2578 = vmatpush1.bf16.msra.mxu0 %v2499
    %2579 = vmatprep.subr.bf16.mxu0 0
    %2580 = vmatpush1.bf16.msra.mxu0 %v2500
    %2581 = vmatprep.mubr.bf16.mxu0 %v2283
    %2582 = vmatmul.mubr.bf16.gmra.mrb[0].mxu0 %v2282
    %v2583 = vpop.f32.mrb[0].mxu0
    %v2584 = vadd.f32 %v2355, %v2583
    %v2585 = vpop.f32.mrb[0].mxu0
    %v2586 = vpop.f32.mrb[0].mxu0
    %v2587 = vpop.f32.mrb[0].mxu0
    %2588 = vdwg.mxu0
    %2589 = vmatprep.subr.bf16.mxu0 0
    %2590 = vmatpush1.bf16.msra.mxu0 %v2501
    %2591 = vmatprep.subr.bf16.mxu0 0
    %2592 = vmatpush1.bf16.msra.mxu0 %v2502
    %2593 = vmatprep.subr.bf16.mxu0 0
    %2594 = vmatpush1.bf16.msra.mxu0 %v2503
    %2595 = vmatprep.subr.bf16.mxu0 0
    %2596 = vmatpush1.bf16.msra.mxu0 %v2504
    %2597 = vmatprep.subr.bf16.mxu0 0
    %2598 = vmatpush1.bf16.msra.mxu0 %v2505
    %2599 = vmatprep.subr.bf16.mxu0 0
    %2600 = vmatpush1.bf16.msra.mxu0 %v2506
    %2601 = vmatprep.subr.bf16.mxu0 0
    %2602 = vmatpush1.bf16.msra.mxu0 %v2507
    %2603 = vmatprep.subr.bf16.mxu0 0
    %2604 = vmatpush1.bf16.msra.mxu0 %v2508
    %2605 = vmatprep.subr.bf16.mxu0 0
    %2606 = vmatpush1.bf16.msra.mxu0 %v2509
    %2607 = vmatprep.subr.bf16.mxu0 0
    %2608 = vmatpush1.bf16.msra.mxu0 %v2510
    %2609 = vmatprep.subr.bf16.mxu0 0
    %2610 = vmatpush1.bf16.msra.mxu0 %v2511
    %2611 = vmatprep.subr.bf16.mxu0 0
    %2612 = vmatpush1.bf16.msra.mxu0 %v2512
    %2613 = vmatprep.subr.bf16.mxu0 0
    %2614 = vmatpush1.bf16.msra.mxu0 %v2513
    %2615 = vmatprep.subr.bf16.mxu0 0
    %2616 = vmatpush1.bf16.msra.mxu0 %v2514
    %2617 = vmatprep.subr.bf16.mxu0 0
    %2618 = vmatpush1.bf16.msra.mxu0 %v2515
    %2619 = vmatprep.subr.bf16.mxu0 0
    %2620 = vmatpush1.bf16.msra.mxu0 %v2516
    %2621 = vmatprep.mubr.bf16.mxu0 %v2285
    %2622 = vmatmul.mubr.bf16.gmra.mrb[0].mxu0 %v2284
    %v2623 = vpop.f32.mrb[0].mxu0
    %v2624 = vadd.f32 %v2584, %v2623
    %v2625 = vpop.f32.mrb[0].mxu0
    %v2626 = vpop.f32.mrb[0].mxu0
    %v2627 = vpop.f32.mrb[0].mxu0
    %2628 = vdwg.mxu0
    %2629 = vst [vmem:[%s9] sm:$0xff] %v2624
    // Predicated region
    $region54: #{dqn_forward.1} parent=1 // pred_check
      _
    $region55: #{dqn_forward.1} parent=1 // pred_check_branch
      %2631 = sbr.rel (0) target = $region57
    $region56: #{dqn_forward.1} parent=1 // pred_region
      _
    $region57: #{dqn_forward.1} parent=1 // pred_fallthru
      _
    // Predicated region
    $region58: #{dqn_forward.1} parent=1 // pred_check
      _
    $region59: #{dqn_forward.1} parent=1 // pred_check_branch
      %2633 = sbr.rel (0) target = $region61
    $region60: #{dqn_forward.1} parent=1 // pred_region
      _
    $region61: #{dqn_forward.1} parent=1 // pred_fallthru
      _
    %2634 = vsyncpa [#allocation3], 1
    %2635 = vsyncpa [#allocation5], 1
    %2636 = vsyncpa [#allocation8], 1

</llo_original>
